<compile_context>
chip_gen: v7x
topology: tpu7x:2x2x1
jax: 0.10.0
libtpu: 0.0.40
codegen_flags: <defaults>
</compile_context>

<pallas_src>
import jax
import jax.numpy as jnp
from jax.experimental import pallas as pl
from jax.experimental.pallas import tpu as pltpu


# ---------------------------------------------------------------------------
# Kernels
# ---------------------------------------------------------------------------
def _se_kernel_lane_dense(x_ref, pool_ref, bcast_ref, w1_ref, b1_ref,
                          w2_ref, b2_ref, o_ref):
    """Flat (TB, C*HW) layout: every HBM-facing load/store is lane-dense.

    pool_ref : (C*HW, C) block-diagonal, entries 1/HW  -> squeeze on the MXU.
    bcast_ref: (C, C*HW) block-diagonal, entries 1.0   -> gate broadcast on MXU.
    """
    x = x_ref[...]                                                 # (TB, CHW)

    # Squeeze: per-channel mean as one MXU matmul (cross-"lane" reduce moved
    # off the XLU, HBM layout stays lane-dense).
    y = jnp.dot(x, pool_ref[...], preferred_element_type=jnp.float32)   # (TB, C)

    # Excitation MLP, batched over the TB rows of this block (single MXU
    # push/pop per block).  Compute is off the critical path; left simple.
    h = jnp.dot(y, w1_ref[...], preferred_element_type=jnp.float32) + b1_ref[...]
    h = jnp.maximum(h, 0.0)                                        # (TB, Cr)
    s = jnp.dot(h, w2_ref[...], preferred_element_type=jnp.float32) + b2_ref[...]
    s = jax.nn.sigmoid(s)                                          # (TB, C) f32

    # Excite: broadcast the per-channel gate back to (TB, C*HW) with a second
    # tiny MXU matmul against the 0/1 block-diagonal matrix, then multiply in
    # the input dtype.
    gate = jnp.dot(s, bcast_ref[...], preferred_element_type=jnp.float32)
    o_ref[...] = x * gate.astype(o_ref.dtype)


def _se_kernel_nchw(x_ref, w1_ref, b1_ref, w2_ref, b2_ref, o_ref):
    """(TB, C, HW) layout: exact spatial reduction.  Used when HW % 128 == 0
    (already lane-dense) or when the pooling matrices would be too large."""
    inv_hw = 1.0 / float(x_ref.shape[-1])                          # compile-time
    x = x_ref[...]

    # Squeeze with fused f32 accumulation (no persistent f32 copy of the tile).
    y = jnp.sum(x, axis=-1, dtype=jnp.float32) * inv_hw            # (TB, C)

    h = jnp.dot(y, w1_ref[...], preferred_element_type=jnp.float32) + b1_ref[...]
    h = jnp.maximum(h, 0.0)
    s = jnp.dot(h, w2_ref[...], preferred_element_type=jnp.float32) + b2_ref[...]
    s = jax.nn.sigmoid(s)                                          # (TB, C) f32

    # Excite: per-vreg broadcast of the (TB, C, 1) gate in the input dtype.
    o_ref[...] = x * s.astype(o_ref.dtype)[:, :, None]


# ---------------------------------------------------------------------------
# Hardware queries & blocking heuristics
# ---------------------------------------------------------------------------
def _round_up(v, m):
    return ((v + m - 1) // m) * m


def _tpu_vmem_capacity_bytes():
    """Physical VMEM per TensorCore (128 MiB on v5e/v6e, 64 MiB on v7x)."""
    try:
        cap = int(pltpu.get_tpu_info().vmem_capacity_bytes)
        if cap > 0:
            return cap
    except Exception:
        pass
    kind = ""
    try:
        kind = jax.devices()[0].device_kind.lower()
    except Exception:
        pass
    if ("v5e" in kind) or ("v5 lite" in kind) or ("v6" in kind):
        return 128 * 1024 * 1024
    return 64 * 1024 * 1024   # conservative default (safe on v7x's 64 MiB)


def _tpu_num_tensorcores():
    """TensorCores sharing the grid under dimension_semantics=('parallel',)."""
    kind = ""
    try:
        kind = jax.devices()[0].device_kind.lower()
    except Exception:
        pass
    return 2 if any(t in kind for t in ("v4", "v5p", "v7")) else 1


def _pick_batch_block(batch, row_vmem_bytes, vmem_limit_bytes, resident_bytes,
                      num_cores, sublane_align):
    """Pick TB (batch rows per grid step) and the grid length.

    Budget ~80% of the scoped VMEM limit, minus the resident weight / pooling
    blocks, spread over the live block copies (x + out, each double-buffered
    by the pipeline, plus ~2 in-kernel full-tile temps -> 6).
    """
    live_copies = 6
    budget = max(int(0.8 * vmem_limit_bytes) - resident_bytes, row_vmem_bytes)
    tb = min(batch, max(1, budget // (live_copies * row_vmem_bytes)))

    # Megacore (v4/v5p/v7x): give every TensorCore at least one block when the
    # batch allows it.  Single-core chips keep one big block (no forced split).
    if num_cores > 1 and batch >= num_cores:
        tb = min(tb, pl.cdiv(batch, num_cores))

    # A partial batch block (2-D flat path) must keep the sublane dim aligned.
    if tb < batch and sublane_align > 1:
        tb = min(batch, max(sublane_align, (tb // sublane_align) * sublane_align))

    num_blocks = pl.cdiv(batch, tb)

    # Keep the grid a multiple of num_cores so no core idles on the tail.
    if num_cores > 1 and num_blocks > 1 and num_blocks % num_cores:
        target = pl.cdiv(num_blocks, num_cores) * num_cores
        tb2 = pl.cdiv(batch, target)
        if tb2 < batch and sublane_align > 1:
            tb2 = min(batch,
                      max(sublane_align, pl.cdiv(tb2, sublane_align) * sublane_align))
        if pl.cdiv(batch, tb2) % num_cores == 0:
            tb = tb2
            num_blocks = pl.cdiv(batch, tb)
    return tb, num_blocks


# ---------------------------------------------------------------------------
# Wrapper
# ---------------------------------------------------------------------------
def se_block(x, w1, b1, w2, b2, *, vmem_limit_bytes=None,
             max_pool_matrix_bytes=4 * 1024 * 1024):
    """SEBlock forward.  x: (B, C, H, W) NCHW.
    w1: (C//r, C), b1: (C//r,), w2: (C, C//r), b2: (C,)."""
    B, C, H, W = x.shape
    Cr = w1.shape[0]
    HW = H * W
    CHW = C * HW
    itemsize = x.dtype.itemsize

    if vmem_limit_bytes is None:
        # ~75% of physical VMEM (=> ~96 MiB on v5e/v6e, ~48 MiB on v7x),
        # leaving headroom for compiler-internal scratch.
        vmem_limit_bytes = (_tpu_vmem_capacity_bytes() * 3) // 4
    num_cores = _tpu_num_tensorcores()

    # Pre-transpose Linear weights so the kernel computes y @ W^T as y @ w_t.
    w1_t = w1.T.astype(jnp.float32)            # (C, Cr)
    w2_t = w2.T.astype(jnp.float32)            # (Cr, C)
    b1_2d = b1.reshape(1, Cr).astype(jnp.float32)
    b2_2d = b2.reshape(1, C).astype(jnp.float32)
    weight_bytes = (w1_t.size + w2_t.size + b1_2d.size + b2_2d.size) * 4

    pool_matrix_bytes = CHW * C * (itemsize + 4)
    use_flat = (HW % 128 != 0) and (pool_matrix_bytes <= max_pool_matrix_bytes)

    compiler_params = pltpu.CompilerParams(
        dimension_semantics=("parallel",),
        vmem_limit_bytes=int(vmem_limit_bytes),
    )

    if use_flat:
        # ---- lane-dense flat path: x viewed as (B, C*HW) (free reshape) ----
        x2d = x.reshape(B, CHW)
        ch = jnp.arange(CHW, dtype=jnp.int32) // HW
        onehot = (ch[:, None] == jnp.arange(C, dtype=jnp.int32)[None, :])
        pool = (onehot.astype(jnp.float32) / float(HW)).astype(x.dtype)   # (CHW, C)
        bcast = onehot.T.astype(jnp.float32)                              # (C, CHW)

        row_vmem = _round_up(CHW, 128) * itemsize
        resident = 2 * (pool.size * pool.dtype.itemsize + bcast.size * 4
                        + weight_bytes)
        sublane = 8 * max(1, 4 // itemsize)     # 8 (f32) / 16 (bf16) / 32 (int8)
        tb, nblk = _pick_batch_block(B, row_vmem, vmem_limit_bytes, resident,
                                     num_cores, sublane)

        out2d = pl.pallas_call(
            _se_kernel_lane_dense,
            out_shape=jax.ShapeDtypeStruct((B, CHW), x.dtype),
            grid_spec=pltpu.PrefetchScalarGridSpec(
                num_scalar_prefetch=0,
                grid=(nblk,),
                in_specs=[
                    pl.BlockSpec((tb, CHW), lambda i: (i, 0)),
                    pl.BlockSpec((CHW, C), lambda i: (0, 0)),
                    pl.BlockSpec((C, CHW), lambda i: (0, 0)),
                    pl.BlockSpec((C, Cr), lambda i: (0, 0)),
                    pl.BlockSpec((1, Cr), lambda i: (0, 0)),
                    pl.BlockSpec((Cr, C), lambda i: (0, 0)),
                    pl.BlockSpec((1, C), lambda i: (0, 0)),
                ],
                out_specs=pl.BlockSpec((tb, CHW), lambda i: (i, 0)),
            ),
            compiler_params=compiler_params,
        )(x2d, pool, bcast, w1_t, b1_2d, w2_t, b2_2d)
        return out2d.reshape(B, C, H, W)

    # ---- native (B, C, HW) path (lane-dense when HW % 128 == 0) ----
    x3d = x.reshape(B, C, HW)
    row_vmem = _round_up(C, 8) * _round_up(HW, 128) * itemsize
    resident = 2 * weight_bytes
    tb, nblk = _pick_batch_block(B, row_vmem, vmem_limit_bytes, resident,
                                 num_cores, 1)

    out3d = pl.pallas_call(
        _se_kernel_nchw,
        out_shape=jax.ShapeDtypeStruct((B, C, HW), x.dtype),
        grid_spec=pltpu.PrefetchScalarGridSpec(
            num_scalar_prefetch=0,
            grid=(nblk,),
            in_specs=[
                pl.BlockSpec((tb, C, HW), lambda i: (i, 0, 0)),
                pl.BlockSpec((C, Cr), lambda i: (0, 0)),
                pl.BlockSpec((1, Cr), lambda i: (0, 0)),
                pl.BlockSpec((Cr, C), lambda i: (0, 0)),
                pl.BlockSpec((1, C), lambda i: (0, 0)),
            ],
            out_specs=pl.BlockSpec((tb, C, HW), lambda i: (i, 0, 0)),
        ),
        compiler_params=compiler_params,
    )(x3d, w1_t, b1_2d, w2_t, b2_2d)
    return out3d.reshape(B, C, H, W)


# ---------------------------------------------------------------------------
# Reference & test
# ---------------------------------------------------------------------------
def _init_linear(key, out_features, in_features):
    """Deterministic init mimicking nn.Linear defaults (uniform +-1/sqrt(fan_in))."""
    kw, kb = jax.random.split(key)
    bound = 1.0 / jnp.sqrt(jnp.float32(in_features))
    w = jax.random.uniform(kw, (out_features, in_features), jnp.float32, -bound, bound)
    b = jax.random.uniform(kb, (out_features,), jnp.float32, -bound, bound)
    return w, b


def _reference(x, w1, b1, w2, b2):
    B, C, H, W = x.shape
    y = x.reshape(B, C, -1).mean(axis=2)
    y = jax.nn.relu(y @ w1.T + b1)
    y = jax.nn.sigmoid(y @ w2.T + b2).reshape(B, C, 1, 1)
    return x * y


if __name__ == "__main__":
    key = jax.random.PRNGKey(0)
    kx1, kx2, k1, k2 = jax.random.split(key, 4)

    # SEBlock(channels=32, reduction=16) -> hidden Cr = 2.
    C, reduction = 32, 16
    Cr = C // reduction
    w1, b1 = _init_linear(k1, Cr, C)   # fc1: (Cr, C), (Cr,)
    w2, b2 = _init_linear(k2, C, Cr)   # fc2: (C, Cr), (C,)

    # Case 1: HW = 64 (not a multiple of 128) -> lane-dense flat path.
    x1 = jax.random.normal(kx1, (2, C, 8, 8), jnp.float32)
    out1 = jax.block_until_ready(se_block(x1, w1, b1, w2, b2))
    ref1 = _reference(x1, w1, b1, w2, b2)
    assert out1.shape == x1.shape
    # MXU default precision may round matmul operands to bf16; the
    # matmul-based squeeze / gate-broadcast can therefore differ from the
    # exact-mean reference at the ~1e-3 relative level.
    assert jnp.allclose(out1, ref1, rtol=1e-2, atol=2e-3), "flat path mismatch"

    # Case 2: HW = 256 (multiple of 128) -> native NCHW path, exact reduction.
    x2 = jax.random.normal(kx2, (4, C, 16, 16), jnp.float32)
    out2 = jax.block_until_ready(se_block(x2, w1, b1, w2, b2))
    ref2 = _reference(x2, w1, b1, w2, b2)
    assert out2.shape == x2.shape
    assert jnp.allclose(out2, ref2, atol=1e-5, rtol=1e-5), "nchw path mismatch"

    print("KERNEL_OK")
</pallas_src>

<mosaic_0001>
module attributes {stable_mosaic.version = 11 : i64} {
  func.func @_se_kernel_lane_dense(%arg0: i32, %arg1: memref<2x2048xf32, #tpu.memory_space<vmem>>, %arg2: memref<2048x32xf32, #tpu.memory_space<vmem>>, %arg3: memref<32x2048xf32, #tpu.memory_space<vmem>>, %arg4: memref<32x2xf32, #tpu.memory_space<vmem>>, %arg5: memref<1x2xf32, #tpu.memory_space<vmem>>, %arg6: memref<2x32xf32, #tpu.memory_space<vmem>>, %arg7: memref<1x32xf32, #tpu.memory_space<vmem>>, %arg8: memref<2x2048xf32, #tpu.memory_space<vmem>>) attributes {dimension_semantics = [#tpu.dimension_semantics<parallel>], iteration_bounds = array<i64: 1>, scalar_prefetch = 0 : i64, scratch_operands = 0 : i64, tpu.core_type = #tpu.core_type<tc>, window_params = [{transform_indices = @transform_0, window_bounds = array<i64: 2, 2048>}, {pipeline_mode = #tpu.pipeline_mode<synchronous>, transform_indices = @transform_1, window_bounds = array<i64: 2048, 32>}, {pipeline_mode = #tpu.pipeline_mode<synchronous>, transform_indices = @transform_2, window_bounds = array<i64: 32, 2048>}, {pipeline_mode = #tpu.pipeline_mode<synchronous>, transform_indices = @transform_3, window_bounds = array<i64: 32, 2>}, {pipeline_mode = #tpu.pipeline_mode<synchronous>, transform_indices = @transform_4, window_bounds = array<i64: 1, 2>}, {pipeline_mode = #tpu.pipeline_mode<synchronous>, transform_indices = @transform_5, window_bounds = array<i64: 2, 32>}, {pipeline_mode = #tpu.pipeline_mode<synchronous>, transform_indices = @transform_6, window_bounds = array<i64: 1, 32>}, {transform_indices = @transform_7, window_bounds = array<i64: 2, 2048>}]} {
    %c0 = arith.constant 0 : index
    %c0_0 = arith.constant 0 : index
    %0 = vector.load %arg1[%c0, %c0_0] : memref<2x2048xf32, #tpu.memory_space<vmem>>, vector<2x2048xf32>
    %c0_1 = arith.constant 0 : index
    %c0_2 = arith.constant 0 : index
    %1 = vector.load %arg2[%c0_1, %c0_2] : memref<2048x32xf32, #tpu.memory_space<vmem>>, vector<2048x32xf32>
    %cst = arith.constant dense<0.000000e+00> : vector<2x32xf32>
    %2 = tpu.matmul %0, %1, %cst {dimension_numbers = #tpu.dot_dimension_numbers<[1], [0], [0], [1], [0, 0, 1, 1], [], []>} : vector<2x2048xf32>, vector<2048x32xf32>, vector<2x32xf32> -> vector<2x32xf32>
    %c0_3 = arith.constant 0 : index
    %c0_4 = arith.constant 0 : index
    %3 = vector.load %arg4[%c0_3, %c0_4] : memref<32x2xf32, #tpu.memory_space<vmem>>, vector<32x2xf32>
    %cst_5 = arith.constant dense<0.000000e+00> : vector<2x2xf32>
    %4 = tpu.matmul %2, %3, %cst_5 {dimension_numbers = #tpu.dot_dimension_numbers<[1], [0], [0], [1], [0, 0, 1, 1], [], []>} : vector<2x32xf32>, vector<32x2xf32>, vector<2x2xf32> -> vector<2x2xf32>
    %c0_6 = arith.constant 0 : index
    %c0_7 = arith.constant 0 : index
    %5 = vector.load %arg5[%c0_6, %c0_7] : memref<1x2xf32, #tpu.memory_space<vmem>>, vector<1x2xf32>
    %6 = vector.broadcast %5 : vector<1x2xf32> to vector<2x2xf32>
    %7 = arith.addf %4, %6 : vector<2x2xf32>
    %cst_8 = arith.constant 0.000000e+00 : f32
    %8 = vector.broadcast %cst_8 : f32 to vector<2x2xf32>
    %9 = arith.maximumf %7, %8 : vector<2x2xf32>
    %c0_9 = arith.constant 0 : index
    %c0_10 = arith.constant 0 : index
    %10 = vector.load %arg6[%c0_9, %c0_10] : memref<2x32xf32, #tpu.memory_space<vmem>>, vector<2x32xf32>
    %cst_11 = arith.constant dense<0.000000e+00> : vector<2x32xf32>
    %11 = tpu.matmul %9, %10, %cst_11 {dimension_numbers = #tpu.dot_dimension_numbers<[1], [0], [0], [1], [0, 0, 1, 1], [], []>} : vector<2x2xf32>, vector<2x32xf32>, vector<2x32xf32> -> vector<2x32xf32>
    %c0_12 = arith.constant 0 : index
    %c0_13 = arith.constant 0 : index
    %12 = vector.load %arg7[%c0_12, %c0_13] : memref<1x32xf32, #tpu.memory_space<vmem>>, vector<1x32xf32>
    %13 = vector.broadcast %12 : vector<1x32xf32> to vector<2x32xf32>
    %14 = arith.addf %11, %13 : vector<2x32xf32>
    %15 = arith.negf %14 : vector<2x32xf32>
    %16 = math.exp %15 : vector<2x32xf32>
    %cst_14 = arith.constant 1.000000e+00 : f32
    %17 = vector.broadcast %cst_14 : f32 to vector<2x32xf32>
    %18 = arith.addf %17, %16 : vector<2x32xf32>
    %19 = arith.divf %17, %18 : vector<2x32xf32>
    %c0_15 = arith.constant 0 : index
    %c0_16 = arith.constant 0 : index
    %20 = vector.load %arg3[%c0_15, %c0_16] : memref<32x2048xf32, #tpu.memory_space<vmem>>, vector<32x2048xf32>
    %cst_17 = arith.constant dense<0.000000e+00> : vector<2x2048xf32>
    %21 = tpu.matmul %19, %20, %cst_17 {dimension_numbers = #tpu.dot_dimension_numbers<[1], [0], [0], [1], [0, 0, 1, 1], [], []>} : vector<2x32xf32>, vector<32x2048xf32>, vector<2x2048xf32> -> vector<2x2048xf32>
    %22 = arith.mulf %0, %21 : vector<2x2048xf32>
    %c0_18 = arith.constant 0 : index
    %c0_19 = arith.constant 0 : index
    %23 = vector.load %arg8[%c0_18, %c0_19] : memref<2x2048xf32, #tpu.memory_space<vmem>>, vector<2x2048xf32>
    tpu.vector_store %arg8[%c0_18, %c0_19], %22 {strides = array<i32>} : memref<2x2048xf32, #tpu.memory_space<vmem>>, vector<2x2048xf32>,
    return
  }
  func.func @transform_0(%arg0: i32) -> (i32, i32) {
    %c0_i32 = arith.constant 0 : i32
    %c0_i32_0 = arith.constant 0 : i32
    return %arg0, %c0_i32 : i32, i32
  }
  func.func @transform_1(%arg0: i32) -> (i32, i32) {
    %c0_i32 = arith.constant 0 : i32
    %c0_i32_0 = arith.constant 0 : i32
    %c0_i32_1 = arith.constant 0 : i32
    return %c0_i32, %c0_i32_0 : i32, i32
  }
  func.func @transform_2(%arg0: i32) -> (i32, i32) {
    %c0_i32 = arith.constant 0 : i32
    %c0_i32_0 = arith.constant 0 : i32
    %c0_i32_1 = arith.constant 0 : i32
    return %c0_i32, %c0_i32_0 : i32, i32
  }
  func.func @transform_3(%arg0: i32) -> (i32, i32) {
    %c0_i32 = arith.constant 0 : i32
    %c0_i32_0 = arith.constant 0 : i32
    %c0_i32_1 = arith.constant 0 : i32
    return %c0_i32, %c0_i32_0 : i32, i32
  }
  func.func @transform_4(%arg0: i32) -> (i32, i32) {
    %c0_i32 = arith.constant 0 : i32
    %c0_i32_0 = arith.constant 0 : i32
    %c0_i32_1 = arith.constant 0 : i32
    return %c0_i32, %c0_i32_0 : i32, i32
  }
  func.func @transform_5(%arg0: i32) -> (i32, i32) {
    %c0_i32 = arith.constant 0 : i32
    %c0_i32_0 = arith.constant 0 : i32
    %c0_i32_1 = arith.constant 0 : i32
    return %c0_i32, %c0_i32_0 : i32, i32
  }
  func.func @transform_6(%arg0: i32) -> (i32, i32) {
    %c0_i32 = arith.constant 0 : i32
    %c0_i32_0 = arith.constant 0 : i32
    %c0_i32_1 = arith.constant 0 : i32
    return %c0_i32, %c0_i32_0 : i32, i32
  }
  func.func @transform_7(%arg0: i32) -> (i32, i32) {
    %c0_i32 = arith.constant 0 : i32
    %c0_i32_0 = arith.constant 0 : i32
    return %arg0, %c0_i32 : i32, i32
  }
}

</mosaic_0001>

<llo_original>
// kernel: tpu_custom_call.1
$region0: #{tpu_custom_call.1}
  #allocation0 [shape = 'u32[]', space=smem, size = 0x4, offset = 0x4, fixed_abs, tag = 'smem constant byte address 0x4 - core index']
  #allocation1 [shape = 'u32[144,128]{1,0:T(1,128)}', space=vmem, size = 0x12000, scoped, tag = 'internal scratch']
  %s0 = inlined_call_operand.vmem [shape: f32[2,2048], index: 0, kind: input, shape index: {}]
  %s1 = inlined_call_operand.vmem [shape: f32[2048,32], index: 1, kind: input, shape index: {}]
  %s2 = inlined_call_operand.vmem [shape: f32[32,2048], index: 2, kind: input, shape index: {}]
  %s3 = inlined_call_operand.vmem [shape: f32[32,2], index: 3, kind: input, shape index: {}]
  %s4 = inlined_call_operand.vmem [shape: f32[1,2], index: 4, kind: input, shape index: {}]
  %s5 = inlined_call_operand.vmem [shape: f32[2,32], index: 5, kind: input, shape index: {}]
  %s6 = inlined_call_operand.vmem [shape: f32[1,32], index: 6, kind: input, shape index: {}]
  %s7 = inlined_call_operand.hbm [shape: f32[2,2048], index: 7, kind: output, shape index: {}]
  %s8 = sld [smem:[#allocation0]]
  $region38: #{tpu_custom_call.1} parent=0
    _
  %s10 = ssub.s32 1, %s8
  %s11 = scalar_select 0, %s10, %s8
  $region1: #{tpu_custom_call.1} parent=0
    #allocation2 [shape = 'u8[16384]{0}', space=vmem, size = 0x4000, scoped, tag = 'output window, operand 0, single buffered']
    #allocation3 [shape = 's32[1]{0}', space=sflag, size = 0x4, scoped, tag = 'scoped memory for tpu_custom_call.1']
    %12 = vsyncpa [#allocation3], 0
    // Predicated region
    $region2: #{tpu_custom_call.1} parent=1 // pred_check
      _
    $region3: #{tpu_custom_call.1} parent=1 // pred_check_branch
      %14 = sbr.rel (0) target = $region5
    $region4: #{tpu_custom_call.1} parent=1 // pred_region
      _
    $region5: #{tpu_custom_call.1} parent=1 // pred_fallthru
      _
    // Predicated region
    $region6: #{tpu_custom_call.1} parent=1 // pred_check
      _
    $region7: #{tpu_custom_call.1} parent=1 // pred_check_branch
      %16 = sbr.rel (0) target = $region9
    $region8: #{tpu_custom_call.1} parent=1 // pred_region
      _
    $region9: #{tpu_custom_call.1} parent=1 // pred_fallthru
      _
    // Predicated region
    $region10: #{tpu_custom_call.1} parent=1 // pred_check
      _
    $region11: #{tpu_custom_call.1} parent=1 // pred_check_branch
      %18 = sbr.rel (0) target = $region13
    $region12: #{tpu_custom_call.1} parent=1 // pred_region
      _
    $region13: #{tpu_custom_call.1} parent=1 // pred_fallthru
      _
    // Predicated region
    $region14: #{tpu_custom_call.1} parent=1 // pred_check
      _
    $region15: #{tpu_custom_call.1} parent=1 // pred_check_branch
      %20 = sbr.rel (0) target = $region17
    $region16: #{tpu_custom_call.1} parent=1 // pred_region
      _
    $region17: #{tpu_custom_call.1} parent=1 // pred_fallthru
      _
    // Predicated region
    $region18: #{tpu_custom_call.1} parent=1 // pred_check
      _
    $region19: #{tpu_custom_call.1} parent=1 // pred_check_branch
      %22 = sbr.rel (0) target = $region21
    $region20: #{tpu_custom_call.1} parent=1 // pred_region
      _
    $region21: #{tpu_custom_call.1} parent=1 // pred_fallthru
      _
    // Predicated region
    $region22: #{tpu_custom_call.1} parent=1 // pred_check
      _
    $region23: #{tpu_custom_call.1} parent=1 // pred_check_branch
      %24 = sbr.rel (0) target = $region25
    $region24: #{tpu_custom_call.1} parent=1 // pred_region
      _
    $region25: #{tpu_custom_call.1} parent=1 // pred_fallthru
      _
    // Predicated region
    $region26: #{tpu_custom_call.1} parent=1 // pred_check
      _
    $region27: #{tpu_custom_call.1} parent=1 // pred_check_branch
      %26 = sbr.rel (0) target = $region29
    $region28: #{tpu_custom_call.1} parent=1 // pred_region
      _
    $region29: #{tpu_custom_call.1} parent=1 // pred_fallthru
      _
    %v27 = vld [vmem:[%s0] sm:$0xff]
    %v28 = vld [vmem:[%s0 + $0x8] sm:$0xff]
    %v29 = vld [vmem:[%s0 + $0x10] sm:$0xff]
    %v30 = vld [vmem:[%s0 + $0x18] sm:$0xff]
    %v31 = vld [vmem:[%s1] sm:$0xff]
    %v32 = vld [vmem:[%s1 + $0x8] sm:$0xff]
    %v33 = vld [vmem:[%s1 + $0x10] sm:$0xff]
    %v34 = vld [vmem:[%s1 + $0x18] sm:$0xff]
    %v35 = vld [vmem:[%s1 + $0x20] sm:$0xff]
    %v36 = vld [vmem:[%s1 + $0x28] sm:$0xff]
    %v37 = vld [vmem:[%s1 + $0x30] sm:$0xff]
    %v38 = vld [vmem:[%s1 + $0x38] sm:$0xff]
    %v39 = vld [vmem:[%s1 + $0x40] sm:$0xff]
    %v40 = vld [vmem:[%s1 + $0x48] sm:$0xff]
    %v41 = vld [vmem:[%s1 + $0x50] sm:$0xff]
    %v42 = vld [vmem:[%s1 + $0x58] sm:$0xff]
    %v43 = vld [vmem:[%s1 + $0x60] sm:$0xff]
    %v44 = vld [vmem:[%s1 + $0x68] sm:$0xff]
    %v45 = vld [vmem:[%s1 + $0x70] sm:$0xff]
    %v46 = vld [vmem:[%s1 + $0x78] sm:$0xff]
    %v47 = vld [vmem:[%s1 + $0x80] sm:$0xff]
    %v48 = vld [vmem:[%s1 + $0x88] sm:$0xff]
    %v49 = vld [vmem:[%s1 + $0x90] sm:$0xff]
    %v50 = vld [vmem:[%s1 + $0x98] sm:$0xff]
    %v51 = vld [vmem:[%s1 + $0xa0] sm:$0xff]
    %v52 = vld [vmem:[%s1 + $0xa8] sm:$0xff]
    %v53 = vld [vmem:[%s1 + $0xb0] sm:$0xff]
    %v54 = vld [vmem:[%s1 + $0xb8] sm:$0xff]
    %v55 = vld [vmem:[%s1 + $0xc0] sm:$0xff]
    %v56 = vld [vmem:[%s1 + $0xc8] sm:$0xff]
    %v57 = vld [vmem:[%s1 + $0xd0] sm:$0xff]
    %v58 = vld [vmem:[%s1 + $0xd8] sm:$0xff]
    %v59 = vld [vmem:[%s1 + $0xe0] sm:$0xff]
    %v60 = vld [vmem:[%s1 + $0xe8] sm:$0xff]
    %v61 = vld [vmem:[%s1 + $0xf0] sm:$0xff]
    %v62 = vld [vmem:[%s1 + $0xf8] sm:$0xff]
    %v63 = vld [vmem:[%s1 + $0x100] sm:$0xff]
    %v64 = vld [vmem:[%s1 + $0x108] sm:$0xff]
    %v65 = vld [vmem:[%s1 + $0x110] sm:$0xff]
    %v66 = vld [vmem:[%s1 + $0x118] sm:$0xff]
    %v67 = vld [vmem:[%s1 + $0x120] sm:$0xff]
    %v68 = vld [vmem:[%s1 + $0x128] sm:$0xff]
    %v69 = vld [vmem:[%s1 + $0x130] sm:$0xff]
    %v70 = vld [vmem:[%s1 + $0x138] sm:$0xff]
    %v71 = vld [vmem:[%s1 + $0x140] sm:$0xff]
    %v72 = vld [vmem:[%s1 + $0x148] sm:$0xff]
    %v73 = vld [vmem:[%s1 + $0x150] sm:$0xff]
    %v74 = vld [vmem:[%s1 + $0x158] sm:$0xff]
    %v75 = vld [vmem:[%s1 + $0x160] sm:$0xff]
    %v76 = vld [vmem:[%s1 + $0x168] sm:$0xff]
    %v77 = vld [vmem:[%s1 + $0x170] sm:$0xff]
    %v78 = vld [vmem:[%s1 + $0x178] sm:$0xff]
    %v79 = vld [vmem:[%s1 + $0x180] sm:$0xff]
    %v80 = vld [vmem:[%s1 + $0x188] sm:$0xff]
    %v81 = vld [vmem:[%s1 + $0x190] sm:$0xff]
    %v82 = vld [vmem:[%s1 + $0x198] sm:$0xff]
    %v83 = vld [vmem:[%s1 + $0x1a0] sm:$0xff]
    %v84 = vld [vmem:[%s1 + $0x1a8] sm:$0xff]
    %v85 = vld [vmem:[%s1 + $0x1b0] sm:$0xff]
    %v86 = vld [vmem:[%s1 + $0x1b8] sm:$0xff]
    %v87 = vld [vmem:[%s1 + $0x1c0] sm:$0xff]
    %v88 = vld [vmem:[%s1 + $0x1c8] sm:$0xff]
    %v89 = vld [vmem:[%s1 + $0x1d0] sm:$0xff]
    %v90 = vld [vmem:[%s1 + $0x1d8] sm:$0xff]
    %v91 = vld [vmem:[%s1 + $0x1e0] sm:$0xff]
    %v92 = vld [vmem:[%s1 + $0x1e8] sm:$0xff]
    %v93 = vld [vmem:[%s1 + $0x1f0] sm:$0xff]
    %v94 = vld [vmem:[%s1 + $0x1f8] sm:$0xff]
    %v95 = vld [vmem:[%s1 + $0x200] sm:$0xff]
    %v96 = vld [vmem:[%s1 + $0x208] sm:$0xff]
    %v97 = vld [vmem:[%s1 + $0x210] sm:$0xff]
    %v98 = vld [vmem:[%s1 + $0x218] sm:$0xff]
    %v99 = vld [vmem:[%s1 + $0x220] sm:$0xff]
    %v100 = vld [vmem:[%s1 + $0x228] sm:$0xff]
    %v101 = vld [vmem:[%s1 + $0x230] sm:$0xff]
    %v102 = vld [vmem:[%s1 + $0x238] sm:$0xff]
    %v103 = vld [vmem:[%s1 + $0x240] sm:$0xff]
    %v104 = vld [vmem:[%s1 + $0x248] sm:$0xff]
    %v105 = vld [vmem:[%s1 + $0x250] sm:$0xff]
    %v106 = vld [vmem:[%s1 + $0x258] sm:$0xff]
    %v107 = vld [vmem:[%s1 + $0x260] sm:$0xff]
    %v108 = vld [vmem:[%s1 + $0x268] sm:$0xff]
    %v109 = vld [vmem:[%s1 + $0x270] sm:$0xff]
    %v110 = vld [vmem:[%s1 + $0x278] sm:$0xff]
    %v111 = vld [vmem:[%s1 + $0x280] sm:$0xff]
    %v112 = vld [vmem:[%s1 + $0x288] sm:$0xff]
    %v113 = vld [vmem:[%s1 + $0x290] sm:$0xff]
    %v114 = vld [vmem:[%s1 + $0x298] sm:$0xff]
    %v115 = vld [vmem:[%s1 + $0x2a0] sm:$0xff]
    %v116 = vld [vmem:[%s1 + $0x2a8] sm:$0xff]
    %v117 = vld [vmem:[%s1 + $0x2b0] sm:$0xff]
    %v118 = vld [vmem:[%s1 + $0x2b8] sm:$0xff]
    %v119 = vld [vmem:[%s1 + $0x2c0] sm:$0xff]
    %v120 = vld [vmem:[%s1 + $0x2c8] sm:$0xff]
    %v121 = vld [vmem:[%s1 + $0x2d0] sm:$0xff]
    %v122 = vld [vmem:[%s1 + $0x2d8] sm:$0xff]
    %v123 = vld [vmem:[%s1 + $0x2e0] sm:$0xff]
    %v124 = vld [vmem:[%s1 + $0x2e8] sm:$0xff]
    %v125 = vld [vmem:[%s1 + $0x2f0] sm:$0xff]
    %v126 = vld [vmem:[%s1 + $0x2f8] sm:$0xff]
    %v127 = vld [vmem:[%s1 + $0x300] sm:$0xff]
    %v128 = vld [vmem:[%s1 + $0x308] sm:$0xff]
    %v129 = vld [vmem:[%s1 + $0x310] sm:$0xff]
    %v130 = vld [vmem:[%s1 + $0x318] sm:$0xff]
    %v131 = vld [vmem:[%s1 + $0x320] sm:$0xff]
    %v132 = vld [vmem:[%s1 + $0x328] sm:$0xff]
    %v133 = vld [vmem:[%s1 + $0x330] sm:$0xff]
    %v134 = vld [vmem:[%s1 + $0x338] sm:$0xff]
    %v135 = vld [vmem:[%s1 + $0x340] sm:$0xff]
    %v136 = vld [vmem:[%s1 + $0x348] sm:$0xff]
    %v137 = vld [vmem:[%s1 + $0x350] sm:$0xff]
    %v138 = vld [vmem:[%s1 + $0x358] sm:$0xff]
    %v139 = vld [vmem:[%s1 + $0x360] sm:$0xff]
    %v140 = vld [vmem:[%s1 + $0x368] sm:$0xff]
    %v141 = vld [vmem:[%s1 + $0x370] sm:$0xff]
    %v142 = vld [vmem:[%s1 + $0x378] sm:$0xff]
    %v143 = vld [vmem:[%s1 + $0x380] sm:$0xff]
    %v144 = vld [vmem:[%s1 + $0x388] sm:$0xff]
    %v145 = vld [vmem:[%s1 + $0x390] sm:$0xff]
    %v146 = vld [vmem:[%s1 + $0x398] sm:$0xff]
    %v147 = vld [vmem:[%s1 + $0x3a0] sm:$0xff]
    %v148 = vld [vmem:[%s1 + $0x3a8] sm:$0xff]
    %v149 = vld [vmem:[%s1 + $0x3b0] sm:$0xff]
    %v150 = vld [vmem:[%s1 + $0x3b8] sm:$0xff]
    %v151 = vld [vmem:[%s1 + $0x3c0] sm:$0xff]
    %v152 = vld [vmem:[%s1 + $0x3c8] sm:$0xff]
    %v153 = vld [vmem:[%s1 + $0x3d0] sm:$0xff]
    %v154 = vld [vmem:[%s1 + $0x3d8] sm:$0xff]
    %v155 = vld [vmem:[%s1 + $0x3e0] sm:$0xff]
    %v156 = vld [vmem:[%s1 + $0x3e8] sm:$0xff]
    %v157 = vld [vmem:[%s1 + $0x3f0] sm:$0xff]
    %v158 = vld [vmem:[%s1 + $0x3f8] sm:$0xff]
    %v159 = vld [vmem:[%s1 + $0x400] sm:$0xff]
    %v160 = vld [vmem:[%s1 + $0x408] sm:$0xff]
    %v161 = vld [vmem:[%s1 + $0x410] sm:$0xff]
    %v162 = vld [vmem:[%s1 + $0x418] sm:$0xff]
    %v163 = vld [vmem:[%s1 + $0x420] sm:$0xff]
    %v164 = vld [vmem:[%s1 + $0x428] sm:$0xff]
    %v165 = vld [vmem:[%s1 + $0x430] sm:$0xff]
    %v166 = vld [vmem:[%s1 + $0x438] sm:$0xff]
    %v167 = vld [vmem:[%s1 + $0x440] sm:$0xff]
    %v168 = vld [vmem:[%s1 + $0x448] sm:$0xff]
    %v169 = vld [vmem:[%s1 + $0x450] sm:$0xff]
    %v170 = vld [vmem:[%s1 + $0x458] sm:$0xff]
    %v171 = vld [vmem:[%s1 + $0x460] sm:$0xff]
    %v172 = vld [vmem:[%s1 + $0x468] sm:$0xff]
    %v173 = vld [vmem:[%s1 + $0x470] sm:$0xff]
    %v174 = vld [vmem:[%s1 + $0x478] sm:$0xff]
    %v175 = vld [vmem:[%s1 + $0x480] sm:$0xff]
    %v176 = vld [vmem:[%s1 + $0x488] sm:$0xff]
    %v177 = vld [vmem:[%s1 + $0x490] sm:$0xff]
    %v178 = vld [vmem:[%s1 + $0x498] sm:$0xff]
    %v179 = vld [vmem:[%s1 + $0x4a0] sm:$0xff]
    %v180 = vld [vmem:[%s1 + $0x4a8] sm:$0xff]
    %v181 = vld [vmem:[%s1 + $0x4b0] sm:$0xff]
    %v182 = vld [vmem:[%s1 + $0x4b8] sm:$0xff]
    %v183 = vld [vmem:[%s1 + $0x4c0] sm:$0xff]
    %v184 = vld [vmem:[%s1 + $0x4c8] sm:$0xff]
    %v185 = vld [vmem:[%s1 + $0x4d0] sm:$0xff]
    %v186 = vld [vmem:[%s1 + $0x4d8] sm:$0xff]
    %v187 = vld [vmem:[%s1 + $0x4e0] sm:$0xff]
    %v188 = vld [vmem:[%s1 + $0x4e8] sm:$0xff]
    %v189 = vld [vmem:[%s1 + $0x4f0] sm:$0xff]
    %v190 = vld [vmem:[%s1 + $0x4f8] sm:$0xff]
    %v191 = vld [vmem:[%s1 + $0x500] sm:$0xff]
    %v192 = vld [vmem:[%s1 + $0x508] sm:$0xff]
    %v193 = vld [vmem:[%s1 + $0x510] sm:$0xff]
    %v194 = vld [vmem:[%s1 + $0x518] sm:$0xff]
    %v195 = vld [vmem:[%s1 + $0x520] sm:$0xff]
    %v196 = vld [vmem:[%s1 + $0x528] sm:$0xff]
    %v197 = vld [vmem:[%s1 + $0x530] sm:$0xff]
    %v198 = vld [vmem:[%s1 + $0x538] sm:$0xff]
    %v199 = vld [vmem:[%s1 + $0x540] sm:$0xff]
    %v200 = vld [vmem:[%s1 + $0x548] sm:$0xff]
    %v201 = vld [vmem:[%s1 + $0x550] sm:$0xff]
    %v202 = vld [vmem:[%s1 + $0x558] sm:$0xff]
    %v203 = vld [vmem:[%s1 + $0x560] sm:$0xff]
    %v204 = vld [vmem:[%s1 + $0x568] sm:$0xff]
    %v205 = vld [vmem:[%s1 + $0x570] sm:$0xff]
    %v206 = vld [vmem:[%s1 + $0x578] sm:$0xff]
    %v207 = vld [vmem:[%s1 + $0x580] sm:$0xff]
    %v208 = vld [vmem:[%s1 + $0x588] sm:$0xff]
    %v209 = vld [vmem:[%s1 + $0x590] sm:$0xff]
    %v210 = vld [vmem:[%s1 + $0x598] sm:$0xff]
    %v211 = vld [vmem:[%s1 + $0x5a0] sm:$0xff]
    %v212 = vld [vmem:[%s1 + $0x5a8] sm:$0xff]
    %v213 = vld [vmem:[%s1 + $0x5b0] sm:$0xff]
    %v214 = vld [vmem:[%s1 + $0x5b8] sm:$0xff]
    %v215 = vld [vmem:[%s1 + $0x5c0] sm:$0xff]
    %v216 = vld [vmem:[%s1 + $0x5c8] sm:$0xff]
    %v217 = vld [vmem:[%s1 + $0x5d0] sm:$0xff]
    %v218 = vld [vmem:[%s1 + $0x5d8] sm:$0xff]
    %v219 = vld [vmem:[%s1 + $0x5e0] sm:$0xff]
    %v220 = vld [vmem:[%s1 + $0x5e8] sm:$0xff]
    %v221 = vld [vmem:[%s1 + $0x5f0] sm:$0xff]
    %v222 = vld [vmem:[%s1 + $0x5f8] sm:$0xff]
    %v223 = vld [vmem:[%s1 + $0x600] sm:$0xff]
    %v224 = vld [vmem:[%s1 + $0x608] sm:$0xff]
    %v225 = vld [vmem:[%s1 + $0x610] sm:$0xff]
    %v226 = vld [vmem:[%s1 + $0x618] sm:$0xff]
    %v227 = vld [vmem:[%s1 + $0x620] sm:$0xff]
    %v228 = vld [vmem:[%s1 + $0x628] sm:$0xff]
    %v229 = vld [vmem:[%s1 + $0x630] sm:$0xff]
    %v230 = vld [vmem:[%s1 + $0x638] sm:$0xff]
    %v231 = vld [vmem:[%s1 + $0x640] sm:$0xff]
    %v232 = vld [vmem:[%s1 + $0x648] sm:$0xff]
    %v233 = vld [vmem:[%s1 + $0x650] sm:$0xff]
    %v234 = vld [vmem:[%s1 + $0x658] sm:$0xff]
    %v235 = vld [vmem:[%s1 + $0x660] sm:$0xff]
    %v236 = vld [vmem:[%s1 + $0x668] sm:$0xff]
    %v237 = vld [vmem:[%s1 + $0x670] sm:$0xff]
    %v238 = vld [vmem:[%s1 + $0x678] sm:$0xff]
    %v239 = vld [vmem:[%s1 + $0x680] sm:$0xff]
    %v240 = vld [vmem:[%s1 + $0x688] sm:$0xff]
    %v241 = vld [vmem:[%s1 + $0x690] sm:$0xff]
    %v242 = vld [vmem:[%s1 + $0x698] sm:$0xff]
    %v243 = vld [vmem:[%s1 + $0x6a0] sm:$0xff]
    %v244 = vld [vmem:[%s1 + $0x6a8] sm:$0xff]
    %v245 = vld [vmem:[%s1 + $0x6b0] sm:$0xff]
    %v246 = vld [vmem:[%s1 + $0x6b8] sm:$0xff]
    %v247 = vld [vmem:[%s1 + $0x6c0] sm:$0xff]
    %v248 = vld [vmem:[%s1 + $0x6c8] sm:$0xff]
    %v249 = vld [vmem:[%s1 + $0x6d0] sm:$0xff]
    %v250 = vld [vmem:[%s1 + $0x6d8] sm:$0xff]
    %v251 = vld [vmem:[%s1 + $0x6e0] sm:$0xff]
    %v252 = vld [vmem:[%s1 + $0x6e8] sm:$0xff]
    %v253 = vld [vmem:[%s1 + $0x6f0] sm:$0xff]
    %v254 = vld [vmem:[%s1 + $0x6f8] sm:$0xff]
    %v255 = vld [vmem:[%s1 + $0x700] sm:$0xff]
    %v256 = vld [vmem:[%s1 + $0x708] sm:$0xff]
    %v257 = vld [vmem:[%s1 + $0x710] sm:$0xff]
    %v258 = vld [vmem:[%s1 + $0x718] sm:$0xff]
    %v259 = vld [vmem:[%s1 + $0x720] sm:$0xff]
    %v260 = vld [vmem:[%s1 + $0x728] sm:$0xff]
    %v261 = vld [vmem:[%s1 + $0x730] sm:$0xff]
    %v262 = vld [vmem:[%s1 + $0x738] sm:$0xff]
    %v263 = vld [vmem:[%s1 + $0x740] sm:$0xff]
    %v264 = vld [vmem:[%s1 + $0x748] sm:$0xff]
    %v265 = vld [vmem:[%s1 + $0x750] sm:$0xff]
    %v266 = vld [vmem:[%s1 + $0x758] sm:$0xff]
    %v267 = vld [vmem:[%s1 + $0x760] sm:$0xff]
    %v268 = vld [vmem:[%s1 + $0x768] sm:$0xff]
    %v269 = vld [vmem:[%s1 + $0x770] sm:$0xff]
    %v270 = vld [vmem:[%s1 + $0x778] sm:$0xff]
    %v271 = vld [vmem:[%s1 + $0x780] sm:$0xff]
    %v272 = vld [vmem:[%s1 + $0x788] sm:$0xff]
    %v273 = vld [vmem:[%s1 + $0x790] sm:$0xff]
    %v274 = vld [vmem:[%s1 + $0x798] sm:$0xff]
    %v275 = vld [vmem:[%s1 + $0x7a0] sm:$0xff]
    %v276 = vld [vmem:[%s1 + $0x7a8] sm:$0xff]
    %v277 = vld [vmem:[%s1 + $0x7b0] sm:$0xff]
    %v278 = vld [vmem:[%s1 + $0x7b8] sm:$0xff]
    %v279 = vld [vmem:[%s1 + $0x7c0] sm:$0xff]
    %v280 = vld [vmem:[%s1 + $0x7c8] sm:$0xff]
    %v281 = vld [vmem:[%s1 + $0x7d0] sm:$0xff]
    %v282 = vld [vmem:[%s1 + $0x7d8] sm:$0xff]
    %v283 = vld [vmem:[%s1 + $0x7e0] sm:$0xff]
    %v284 = vld [vmem:[%s1 + $0x7e8] sm:$0xff]
    %v285 = vld [vmem:[%s1 + $0x7f0] sm:$0xff]
    %v286 = vld [vmem:[%s1 + $0x7f8] sm:$0xff]
    %v291 = vcombine.high %v27, %v27
    %v293 = vunpack.c.l.s4 1983009808
    %v294 = vunpack.c.0.s8 %v293
    %v295 = vlaneseq
    %v296 = vshrl.u32 %v295, 7
    %v297 = vsub.s32 %v294, %v296
    %v298 = vrot.slane %v27, %v297
    %v300 = vunpack.c.l.s4 1983009808
    %v301 = vunpack.c.0.s8 %v300
    %v302 = vlaneseq
    %v303 = vshrl.u32 %v302, 7
    %v304 = vsub.s32 %v301, %v303
    %v305 = vrot.slane %v291, %v304
    %v306 = vcombine.high %v298, %v298
    %v307 = vcombine.high %v305, %v305
    %v308 = vcombine.high %v28, %v28
    %v310 = vunpack.c.l.s4 1983009808
    %v311 = vunpack.c.0.s8 %v310
    %v312 = vlaneseq
    %v313 = vshrl.u32 %v312, 7
    %v314 = vsub.s32 %v311, %v313
    %v315 = vrot.slane %v28, %v314
    %v317 = vunpack.c.l.s4 1983009808
    %v318 = vunpack.c.0.s8 %v317
    %v319 = vlaneseq
    %v320 = vshrl.u32 %v319, 7
    %v321 = vsub.s32 %v318, %v320
    %v322 = vrot.slane %v308, %v321
    %v323 = vcombine.high %v315, %v315
    %v324 = vcombine.high %v322, %v322
    %v325 = vcombine.high %v29, %v29
    %v327 = vunpack.c.l.s4 1983009808
    %v328 = vunpack.c.0.s8 %v327
    %v329 = vlaneseq
    %v330 = vshrl.u32 %v329, 7
    %v331 = vsub.s32 %v328, %v330
    %v332 = vrot.slane %v29, %v331
    %v334 = vunpack.c.l.s4 1983009808
    %v335 = vunpack.c.0.s8 %v334
    %v336 = vlaneseq
    %v337 = vshrl.u32 %v336, 7
    %v338 = vsub.s32 %v335, %v337
    %v339 = vrot.slane %v325, %v338
    %v340 = vcombine.high %v332, %v332
    %v341 = vcombine.high %v339, %v339
    %v342 = vcombine.high %v30, %v30
    %v344 = vunpack.c.l.s4 1983009808
    %v345 = vunpack.c.0.s8 %v344
    %v346 = vlaneseq
    %v347 = vshrl.u32 %v346, 7
    %v348 = vsub.s32 %v345, %v347
    %v349 = vrot.slane %v30, %v348
    %v351 = vunpack.c.l.s4 1983009808
    %v352 = vunpack.c.0.s8 %v351
    %v353 = vlaneseq
    %v354 = vshrl.u32 %v353, 7
    %v355 = vsub.s32 %v352, %v354
    %v356 = vrot.slane %v342, %v355
    %v357 = vcombine.high %v349, %v349
    %v358 = vcombine.high %v356, %v356
    %375 = vmatprep.subr.mxu0 0.0
    %376 = vmatpush1.msra.mxu0 %v31
    %377 = vmatprep.subr.mxu0 0.0
    %378 = vmatpush1.msra.mxu0 %v32
    %379 = vmatprep.subr.mxu0 0.0
    %380 = vmatpush1.msra.mxu0 %v33
    %381 = vmatprep.subr.mxu0 0.0
    %382 = vmatpush1.msra.mxu0 %v34
    %383 = vmatprep.subr.mxu0 0.0
    %384 = vmatpush1.msra.mxu0 %v35
    %385 = vmatprep.subr.mxu0 0.0
    %386 = vmatpush1.msra.mxu0 %v36
    %387 = vmatprep.subr.mxu0 0.0
    %388 = vmatpush1.msra.mxu0 %v37
    %389 = vmatprep.subr.mxu0 0.0
    %390 = vmatpush1.msra.mxu0 %v38
    %391 = vmatprep.subr.mxu0 0.0
    %392 = vmatpush1.msra.mxu0 %v39
    %393 = vmatprep.subr.mxu0 0.0
    %394 = vmatpush1.msra.mxu0 %v40
    %395 = vmatprep.subr.mxu0 0.0
    %396 = vmatpush1.msra.mxu0 %v41
    %397 = vmatprep.subr.mxu0 0.0
    %398 = vmatpush1.msra.mxu0 %v42
    %399 = vmatprep.subr.mxu0 0.0
    %400 = vmatpush1.msra.mxu0 %v43
    %401 = vmatprep.subr.mxu0 0.0
    %402 = vmatpush1.msra.mxu0 %v44
    %403 = vmatprep.subr.mxu0 0.0
    %404 = vmatpush1.msra.mxu0 %v45
    %405 = vmatprep.subr.mxu0 0.0
    %406 = vmatpush1.msra.mxu0 %v46
    %407 = vmatprep.subr.mxu0 0.0
    %408 = vmatpush1.msra.mxu0 %v47
    %409 = vmatprep.subr.mxu0 0.0
    %410 = vmatpush1.msra.mxu0 %v48
    %411 = vmatprep.subr.mxu0 0.0
    %412 = vmatpush1.msra.mxu0 %v49
    %413 = vmatprep.subr.mxu0 0.0
    %414 = vmatpush1.msra.mxu0 %v50
    %415 = vmatprep.subr.mxu0 0.0
    %416 = vmatpush1.msra.mxu0 %v51
    %417 = vmatprep.subr.mxu0 0.0
    %418 = vmatpush1.msra.mxu0 %v52
    %419 = vmatprep.subr.mxu0 0.0
    %420 = vmatpush1.msra.mxu0 %v53
    %421 = vmatprep.subr.mxu0 0.0
    %422 = vmatpush1.msra.mxu0 %v54
    %423 = vmatprep.subr.mxu0 0.0
    %424 = vmatpush1.msra.mxu0 %v55
    %425 = vmatprep.subr.mxu0 0.0
    %426 = vmatpush1.msra.mxu0 %v56
    %427 = vmatprep.subr.mxu0 0.0
    %428 = vmatpush1.msra.mxu0 %v57
    %429 = vmatprep.subr.mxu0 0.0
    %430 = vmatpush1.msra.mxu0 %v58
    %431 = vmatprep.subr.mxu0 0.0
    %432 = vmatpush1.msra.mxu0 %v59
    %433 = vmatprep.subr.mxu0 0.0
    %434 = vmatpush1.msra.mxu0 %v60
    %435 = vmatprep.subr.mxu0 0.0
    %436 = vmatpush1.msra.mxu0 %v61
    %437 = vmatprep.subr.mxu0 0.0
    %438 = vmatpush1.msra.mxu0 %v62
    %439 = vmatprep.mubr.f32.mxu0 %v306
    %440 = vmatmul.mubr.f32.gmra.mrb[0].mxu0 %v298
    %v441 = vpop.f32.mrb[0].mxu0
    %v442 = vadd.f32 0.0, %v441
    %v443 = vpop.f32.mrb[0].mxu0
    %444 = vdwg.mxu0
    %445 = vmatprep.subr.mxu0 0.0
    %446 = vmatpush1.msra.mxu0 %v63
    %447 = vmatprep.subr.mxu0 0.0
    %448 = vmatpush1.msra.mxu0 %v64
    %449 = vmatprep.subr.mxu0 0.0
    %450 = vmatpush1.msra.mxu0 %v65
    %451 = vmatprep.subr.mxu0 0.0
    %452 = vmatpush1.msra.mxu0 %v66
    %453 = vmatprep.subr.mxu0 0.0
    %454 = vmatpush1.msra.mxu0 %v67
    %455 = vmatprep.subr.mxu0 0.0
    %456 = vmatpush1.msra.mxu0 %v68
    %457 = vmatprep.subr.mxu0 0.0
    %458 = vmatpush1.msra.mxu0 %v69
    %459 = vmatprep.subr.mxu0 0.0
    %460 = vmatpush1.msra.mxu0 %v70
    %461 = vmatprep.subr.mxu0 0.0
    %462 = vmatpush1.msra.mxu0 %v71
    %463 = vmatprep.subr.mxu0 0.0
    %464 = vmatpush1.msra.mxu0 %v72
    %465 = vmatprep.subr.mxu0 0.0
    %466 = vmatpush1.msra.mxu0 %v73
    %467 = vmatprep.subr.mxu0 0.0
    %468 = vmatpush1.msra.mxu0 %v74
    %469 = vmatprep.subr.mxu0 0.0
    %470 = vmatpush1.msra.mxu0 %v75
    %471 = vmatprep.subr.mxu0 0.0
    %472 = vmatpush1.msra.mxu0 %v76
    %473 = vmatprep.subr.mxu0 0.0
    %474 = vmatpush1.msra.mxu0 %v77
    %475 = vmatprep.subr.mxu0 0.0
    %476 = vmatpush1.msra.mxu0 %v78
    %477 = vmatprep.subr.mxu0 0.0
    %478 = vmatpush1.msra.mxu0 %v79
    %479 = vmatprep.subr.mxu0 0.0
    %480 = vmatpush1.msra.mxu0 %v80
    %481 = vmatprep.subr.mxu0 0.0
    %482 = vmatpush1.msra.mxu0 %v81
    %483 = vmatprep.subr.mxu0 0.0
    %484 = vmatpush1.msra.mxu0 %v82
    %485 = vmatprep.subr.mxu0 0.0
    %486 = vmatpush1.msra.mxu0 %v83
    %487 = vmatprep.subr.mxu0 0.0
    %488 = vmatpush1.msra.mxu0 %v84
    %489 = vmatprep.subr.mxu0 0.0
    %490 = vmatpush1.msra.mxu0 %v85
    %491 = vmatprep.subr.mxu0 0.0
    %492 = vmatpush1.msra.mxu0 %v86
    %493 = vmatprep.subr.mxu0 0.0
    %494 = vmatpush1.msra.mxu0 %v87
    %495 = vmatprep.subr.mxu0 0.0
    %496 = vmatpush1.msra.mxu0 %v88
    %497 = vmatprep.subr.mxu0 0.0
    %498 = vmatpush1.msra.mxu0 %v89
    %499 = vmatprep.subr.mxu0 0.0
    %500 = vmatpush1.msra.mxu0 %v90
    %501 = vmatprep.subr.mxu0 0.0
    %502 = vmatpush1.msra.mxu0 %v91
    %503 = vmatprep.subr.mxu0 0.0
    %504 = vmatpush1.msra.mxu0 %v92
    %505 = vmatprep.subr.mxu0 0.0
    %506 = vmatpush1.msra.mxu0 %v93
    %507 = vmatprep.subr.mxu0 0.0
    %508 = vmatpush1.msra.mxu0 %v94
    %509 = vmatprep.mubr.f32.mxu0 %v307
    %510 = vmatmul.mubr.f32.gmra.mrb[0].mxu0 %v305
    %v511 = vpop.f32.mrb[0].mxu0
    %v512 = vadd.f32 %v442, %v511
    %v513 = vpop.f32.mrb[0].mxu0
    %514 = vdwg.mxu0
    %515 = vmatprep.subr.mxu0 0.0
    %516 = vmatpush1.msra.mxu0 %v95
    %517 = vmatprep.subr.mxu0 0.0
    %518 = vmatpush1.msra.mxu0 %v96
    %519 = vmatprep.subr.mxu0 0.0
    %520 = vmatpush1.msra.mxu0 %v97
    %521 = vmatprep.subr.mxu0 0.0
    %522 = vmatpush1.msra.mxu0 %v98
    %523 = vmatprep.subr.mxu0 0.0
    %524 = vmatpush1.msra.mxu0 %v99
    %525 = vmatprep.subr.mxu0 0.0
    %526 = vmatpush1.msra.mxu0 %v100
    %527 = vmatprep.subr.mxu0 0.0
    %528 = vmatpush1.msra.mxu0 %v101
    %529 = vmatprep.subr.mxu0 0.0
    %530 = vmatpush1.msra.mxu0 %v102
    %531 = vmatprep.subr.mxu0 0.0
    %532 = vmatpush1.msra.mxu0 %v103
    %533 = vmatprep.subr.mxu0 0.0
    %534 = vmatpush1.msra.mxu0 %v104
    %535 = vmatprep.subr.mxu0 0.0
    %536 = vmatpush1.msra.mxu0 %v105
    %537 = vmatprep.subr.mxu0 0.0
    %538 = vmatpush1.msra.mxu0 %v106
    %539 = vmatprep.subr.mxu0 0.0
    %540 = vmatpush1.msra.mxu0 %v107
    %541 = vmatprep.subr.mxu0 0.0
    %542 = vmatpush1.msra.mxu0 %v108
    %543 = vmatprep.subr.mxu0 0.0
    %544 = vmatpush1.msra.mxu0 %v109
    %545 = vmatprep.subr.mxu0 0.0
    %546 = vmatpush1.msra.mxu0 %v110
    %547 = vmatprep.subr.mxu0 0.0
    %548 = vmatpush1.msra.mxu0 %v111
    %549 = vmatprep.subr.mxu0 0.0
    %550 = vmatpush1.msra.mxu0 %v112
    %551 = vmatprep.subr.mxu0 0.0
    %552 = vmatpush1.msra.mxu0 %v113
    %553 = vmatprep.subr.mxu0 0.0
    %554 = vmatpush1.msra.mxu0 %v114
    %555 = vmatprep.subr.mxu0 0.0
    %556 = vmatpush1.msra.mxu0 %v115
    %557 = vmatprep.subr.mxu0 0.0
    %558 = vmatpush1.msra.mxu0 %v116
    %559 = vmatprep.subr.mxu0 0.0
    %560 = vmatpush1.msra.mxu0 %v117
    %561 = vmatprep.subr.mxu0 0.0
    %562 = vmatpush1.msra.mxu0 %v118
    %563 = vmatprep.subr.mxu0 0.0
    %564 = vmatpush1.msra.mxu0 %v119
    %565 = vmatprep.subr.mxu0 0.0
    %566 = vmatpush1.msra.mxu0 %v120
    %567 = vmatprep.subr.mxu0 0.0
    %568 = vmatpush1.msra.mxu0 %v121
    %569 = vmatprep.subr.mxu0 0.0
    %570 = vmatpush1.msra.mxu0 %v122
    %571 = vmatprep.subr.mxu0 0.0
    %572 = vmatpush1.msra.mxu0 %v123
    %573 = vmatprep.subr.mxu0 0.0
    %574 = vmatpush1.msra.mxu0 %v124
    %575 = vmatprep.subr.mxu0 0.0
    %576 = vmatpush1.msra.mxu0 %v125
    %577 = vmatprep.subr.mxu0 0.0
    %578 = vmatpush1.msra.mxu0 %v126
    %579 = vmatprep.mubr.f32.mxu0 %v323
    %580 = vmatmul.mubr.f32.gmra.mrb[0].mxu0 %v315
    %v581 = vpop.f32.mrb[0].mxu0
    %v582 = vadd.f32 %v512, %v581
    %v583 = vpop.f32.mrb[0].mxu0
    %584 = vdwg.mxu0
    %585 = vmatprep.subr.mxu0 0.0
    %586 = vmatpush1.msra.mxu0 %v127
    %587 = vmatprep.subr.mxu0 0.0
    %588 = vmatpush1.msra.mxu0 %v128
    %589 = vmatprep.subr.mxu0 0.0
    %590 = vmatpush1.msra.mxu0 %v129
    %591 = vmatprep.subr.mxu0 0.0
    %592 = vmatpush1.msra.mxu0 %v130
    %593 = vmatprep.subr.mxu0 0.0
    %594 = vmatpush1.msra.mxu0 %v131
    %595 = vmatprep.subr.mxu0 0.0
    %596 = vmatpush1.msra.mxu0 %v132
    %597 = vmatprep.subr.mxu0 0.0
    %598 = vmatpush1.msra.mxu0 %v133
    %599 = vmatprep.subr.mxu0 0.0
    %600 = vmatpush1.msra.mxu0 %v134
    %601 = vmatprep.subr.mxu0 0.0
    %602 = vmatpush1.msra.mxu0 %v135
    %603 = vmatprep.subr.mxu0 0.0
    %604 = vmatpush1.msra.mxu0 %v136
    %605 = vmatprep.subr.mxu0 0.0
    %606 = vmatpush1.msra.mxu0 %v137
    %607 = vmatprep.subr.mxu0 0.0
    %608 = vmatpush1.msra.mxu0 %v138
    %609 = vmatprep.subr.mxu0 0.0
    %610 = vmatpush1.msra.mxu0 %v139
    %611 = vmatprep.subr.mxu0 0.0
    %612 = vmatpush1.msra.mxu0 %v140
    %613 = vmatprep.subr.mxu0 0.0
    %614 = vmatpush1.msra.mxu0 %v141
    %615 = vmatprep.subr.mxu0 0.0
    %616 = vmatpush1.msra.mxu0 %v142
    %617 = vmatprep.subr.mxu0 0.0
    %618 = vmatpush1.msra.mxu0 %v143
    %619 = vmatprep.subr.mxu0 0.0
    %620 = vmatpush1.msra.mxu0 %v144
    %621 = vmatprep.subr.mxu0 0.0
    %622 = vmatpush1.msra.mxu0 %v145
    %623 = vmatprep.subr.mxu0 0.0
    %624 = vmatpush1.msra.mxu0 %v146
    %625 = vmatprep.subr.mxu0 0.0
    %626 = vmatpush1.msra.mxu0 %v147
    %627 = vmatprep.subr.mxu0 0.0
    %628 = vmatpush1.msra.mxu0 %v148
    %629 = vmatprep.subr.mxu0 0.0
    %630 = vmatpush1.msra.mxu0 %v149
    %631 = vmatprep.subr.mxu0 0.0
    %632 = vmatpush1.msra.mxu0 %v150
    %633 = vmatprep.subr.mxu0 0.0
    %634 = vmatpush1.msra.mxu0 %v151
    %635 = vmatprep.subr.mxu0 0.0
    %636 = vmatpush1.msra.mxu0 %v152
    %637 = vmatprep.subr.mxu0 0.0
    %638 = vmatpush1.msra.mxu0 %v153
    %639 = vmatprep.subr.mxu0 0.0
    %640 = vmatpush1.msra.mxu0 %v154
    %641 = vmatprep.subr.mxu0 0.0
    %642 = vmatpush1.msra.mxu0 %v155
    %643 = vmatprep.subr.mxu0 0.0
    %644 = vmatpush1.msra.mxu0 %v156
    %645 = vmatprep.subr.mxu0 0.0
    %646 = vmatpush1.msra.mxu0 %v157
    %647 = vmatprep.subr.mxu0 0.0
    %648 = vmatpush1.msra.mxu0 %v158
    %649 = vmatprep.mubr.f32.mxu0 %v324
    %650 = vmatmul.mubr.f32.gmra.mrb[0].mxu0 %v322
    %v651 = vpop.f32.mrb[0].mxu0
    %v652 = vadd.f32 %v582, %v651
    %v653 = vpop.f32.mrb[0].mxu0
    %654 = vdwg.mxu0
    %655 = vmatprep.subr.mxu0 0.0
    %656 = vmatpush1.msra.mxu0 %v159
    %657 = vmatprep.subr.mxu0 0.0
    %658 = vmatpush1.msra.mxu0 %v160
    %659 = vmatprep.subr.mxu0 0.0
    %660 = vmatpush1.msra.mxu0 %v161
    %661 = vmatprep.subr.mxu0 0.0
    %662 = vmatpush1.msra.mxu0 %v162
    %663 = vmatprep.subr.mxu0 0.0
    %664 = vmatpush1.msra.mxu0 %v163
    %665 = vmatprep.subr.mxu0 0.0
    %666 = vmatpush1.msra.mxu0 %v164
    %667 = vmatprep.subr.mxu0 0.0
    %668 = vmatpush1.msra.mxu0 %v165
    %669 = vmatprep.subr.mxu0 0.0
    %670 = vmatpush1.msra.mxu0 %v166
    %671 = vmatprep.subr.mxu0 0.0
    %672 = vmatpush1.msra.mxu0 %v167
    %673 = vmatprep.subr.mxu0 0.0
    %674 = vmatpush1.msra.mxu0 %v168
    %675 = vmatprep.subr.mxu0 0.0
    %676 = vmatpush1.msra.mxu0 %v169
    %677 = vmatprep.subr.mxu0 0.0
    %678 = vmatpush1.msra.mxu0 %v170
    %679 = vmatprep.subr.mxu0 0.0
    %680 = vmatpush1.msra.mxu0 %v171
    %681 = vmatprep.subr.mxu0 0.0
    %682 = vmatpush1.msra.mxu0 %v172
    %683 = vmatprep.subr.mxu0 0.0
    %684 = vmatpush1.msra.mxu0 %v173
    %685 = vmatprep.subr.mxu0 0.0
    %686 = vmatpush1.msra.mxu0 %v174
    %687 = vmatprep.subr.mxu0 0.0
    %688 = vmatpush1.msra.mxu0 %v175
    %689 = vmatprep.subr.mxu0 0.0
    %690 = vmatpush1.msra.mxu0 %v176
    %691 = vmatprep.subr.mxu0 0.0
    %692 = vmatpush1.msra.mxu0 %v177
    %693 = vmatprep.subr.mxu0 0.0
    %694 = vmatpush1.msra.mxu0 %v178
    %695 = vmatprep.subr.mxu0 0.0
    %696 = vmatpush1.msra.mxu0 %v179
    %697 = vmatprep.subr.mxu0 0.0
    %698 = vmatpush1.msra.mxu0 %v180
    %699 = vmatprep.subr.mxu0 0.0
    %700 = vmatpush1.msra.mxu0 %v181
    %701 = vmatprep.subr.mxu0 0.0
    %702 = vmatpush1.msra.mxu0 %v182
    %703 = vmatprep.subr.mxu0 0.0
    %704 = vmatpush1.msra.mxu0 %v183
    %705 = vmatprep.subr.mxu0 0.0
    %706 = vmatpush1.msra.mxu0 %v184
    %707 = vmatprep.subr.mxu0 0.0
    %708 = vmatpush1.msra.mxu0 %v185
    %709 = vmatprep.subr.mxu0 0.0
    %710 = vmatpush1.msra.mxu0 %v186
    %711 = vmatprep.subr.mxu0 0.0
    %712 = vmatpush1.msra.mxu0 %v187
    %713 = vmatprep.subr.mxu0 0.0
    %714 = vmatpush1.msra.mxu0 %v188
    %715 = vmatprep.subr.mxu0 0.0
    %716 = vmatpush1.msra.mxu0 %v189
    %717 = vmatprep.subr.mxu0 0.0
    %718 = vmatpush1.msra.mxu0 %v190
    %719 = vmatprep.mubr.f32.mxu0 %v340
    %720 = vmatmul.mubr.f32.gmra.mrb[0].mxu0 %v332
    %v721 = vpop.f32.mrb[0].mxu0
    %v722 = vadd.f32 %v652, %v721
    %v723 = vpop.f32.mrb[0].mxu0
    %724 = vdwg.mxu0
    %725 = vmatprep.subr.mxu0 0.0
    %726 = vmatpush1.msra.mxu0 %v191
    %727 = vmatprep.subr.mxu0 0.0
    %728 = vmatpush1.msra.mxu0 %v192
    %729 = vmatprep.subr.mxu0 0.0
    %730 = vmatpush1.msra.mxu0 %v193
    %731 = vmatprep.subr.mxu0 0.0
    %732 = vmatpush1.msra.mxu0 %v194
    %733 = vmatprep.subr.mxu0 0.0
    %734 = vmatpush1.msra.mxu0 %v195
    %735 = vmatprep.subr.mxu0 0.0
    %736 = vmatpush1.msra.mxu0 %v196
    %737 = vmatprep.subr.mxu0 0.0
    %738 = vmatpush1.msra.mxu0 %v197
    %739 = vmatprep.subr.mxu0 0.0
    %740 = vmatpush1.msra.mxu0 %v198
    %741 = vmatprep.subr.mxu0 0.0
    %742 = vmatpush1.msra.mxu0 %v199
    %743 = vmatprep.subr.mxu0 0.0
    %744 = vmatpush1.msra.mxu0 %v200
    %745 = vmatprep.subr.mxu0 0.0
    %746 = vmatpush1.msra.mxu0 %v201
    %747 = vmatprep.subr.mxu0 0.0
    %748 = vmatpush1.msra.mxu0 %v202
    %749 = vmatprep.subr.mxu0 0.0
    %750 = vmatpush1.msra.mxu0 %v203
    %751 = vmatprep.subr.mxu0 0.0
    %752 = vmatpush1.msra.mxu0 %v204
    %753 = vmatprep.subr.mxu0 0.0
    %754 = vmatpush1.msra.mxu0 %v205
    %755 = vmatprep.subr.mxu0 0.0
    %756 = vmatpush1.msra.mxu0 %v206
    %757 = vmatprep.subr.mxu0 0.0
    %758 = vmatpush1.msra.mxu0 %v207
    %759 = vmatprep.subr.mxu0 0.0
    %760 = vmatpush1.msra.mxu0 %v208
    %761 = vmatprep.subr.mxu0 0.0
    %762 = vmatpush1.msra.mxu0 %v209
    %763 = vmatprep.subr.mxu0 0.0
    %764 = vmatpush1.msra.mxu0 %v210
    %765 = vmatprep.subr.mxu0 0.0
    %766 = vmatpush1.msra.mxu0 %v211
    %767 = vmatprep.subr.mxu0 0.0
    %768 = vmatpush1.msra.mxu0 %v212
    %769 = vmatprep.subr.mxu0 0.0
    %770 = vmatpush1.msra.mxu0 %v213
    %771 = vmatprep.subr.mxu0 0.0
    %772 = vmatpush1.msra.mxu0 %v214
    %773 = vmatprep.subr.mxu0 0.0
    %774 = vmatpush1.msra.mxu0 %v215
    %775 = vmatprep.subr.mxu0 0.0
    %776 = vmatpush1.msra.mxu0 %v216
    %777 = vmatprep.subr.mxu0 0.0
    %778 = vmatpush1.msra.mxu0 %v217
    %779 = vmatprep.subr.mxu0 0.0
    %780 = vmatpush1.msra.mxu0 %v218
    %781 = vmatprep.subr.mxu0 0.0
    %782 = vmatpush1.msra.mxu0 %v219
    %783 = vmatprep.subr.mxu0 0.0
    %784 = vmatpush1.msra.mxu0 %v220
    %785 = vmatprep.subr.mxu0 0.0
    %786 = vmatpush1.msra.mxu0 %v221
    %787 = vmatprep.subr.mxu0 0.0
    %788 = vmatpush1.msra.mxu0 %v222
    %789 = vmatprep.mubr.f32.mxu0 %v341
    %790 = vmatmul.mubr.f32.gmra.mrb[0].mxu0 %v339
    %v791 = vpop.f32.mrb[0].mxu0
    %v792 = vadd.f32 %v722, %v791
    %v793 = vpop.f32.mrb[0].mxu0
    %794 = vdwg.mxu0
    %795 = vmatprep.subr.mxu0 0.0
    %796 = vmatpush1.msra.mxu0 %v223
    %797 = vmatprep.subr.mxu0 0.0
    %798 = vmatpush1.msra.mxu0 %v224
    %799 = vmatprep.subr.mxu0 0.0
    %800 = vmatpush1.msra.mxu0 %v225
    %801 = vmatprep.subr.mxu0 0.0
    %802 = vmatpush1.msra.mxu0 %v226
    %803 = vmatprep.subr.mxu0 0.0
    %804 = vmatpush1.msra.mxu0 %v227
    %805 = vmatprep.subr.mxu0 0.0
    %806 = vmatpush1.msra.mxu0 %v228
    %807 = vmatprep.subr.mxu0 0.0
    %808 = vmatpush1.msra.mxu0 %v229
    %809 = vmatprep.subr.mxu0 0.0
    %810 = vmatpush1.msra.mxu0 %v230
    %811 = vmatprep.subr.mxu0 0.0
    %812 = vmatpush1.msra.mxu0 %v231
    %813 = vmatprep.subr.mxu0 0.0
    %814 = vmatpush1.msra.mxu0 %v232
    %815 = vmatprep.subr.mxu0 0.0
    %816 = vmatpush1.msra.mxu0 %v233
    %817 = vmatprep.subr.mxu0 0.0
    %818 = vmatpush1.msra.mxu0 %v234
    %819 = vmatprep.subr.mxu0 0.0
    %820 = vmatpush1.msra.mxu0 %v235
    %821 = vmatprep.subr.mxu0 0.0
    %822 = vmatpush1.msra.mxu0 %v236
    %823 = vmatprep.subr.mxu0 0.0
    %824 = vmatpush1.msra.mxu0 %v237
    %825 = vmatprep.subr.mxu0 0.0
    %826 = vmatpush1.msra.mxu0 %v238
    %827 = vmatprep.subr.mxu0 0.0
    %828 = vmatpush1.msra.mxu0 %v239
    %829 = vmatprep.subr.mxu0 0.0
    %830 = vmatpush1.msra.mxu0 %v240
    %831 = vmatprep.subr.mxu0 0.0
    %832 = vmatpush1.msra.mxu0 %v241
    %833 = vmatprep.subr.mxu0 0.0
    %834 = vmatpush1.msra.mxu0 %v242
    %835 = vmatprep.subr.mxu0 0.0
    %836 = vmatpush1.msra.mxu0 %v243
    %837 = vmatprep.subr.mxu0 0.0
    %838 = vmatpush1.msra.mxu0 %v244
    %839 = vmatprep.subr.mxu0 0.0
    %840 = vmatpush1.msra.mxu0 %v245
    %841 = vmatprep.subr.mxu0 0.0
    %842 = vmatpush1.msra.mxu0 %v246
    %843 = vmatprep.subr.mxu0 0.0
    %844 = vmatpush1.msra.mxu0 %v247
    %845 = vmatprep.subr.mxu0 0.0
    %846 = vmatpush1.msra.mxu0 %v248
    %847 = vmatprep.subr.mxu0 0.0
    %848 = vmatpush1.msra.mxu0 %v249
    %849 = vmatprep.subr.mxu0 0.0
    %850 = vmatpush1.msra.mxu0 %v250
    %851 = vmatprep.subr.mxu0 0.0
    %852 = vmatpush1.msra.mxu0 %v251
    %853 = vmatprep.subr.mxu0 0.0
    %854 = vmatpush1.msra.mxu0 %v252
    %855 = vmatprep.subr.mxu0 0.0
    %856 = vmatpush1.msra.mxu0 %v253
    %857 = vmatprep.subr.mxu0 0.0
    %858 = vmatpush1.msra.mxu0 %v254
    %859 = vmatprep.mubr.f32.mxu0 %v357
    %860 = vmatmul.mubr.f32.gmra.mrb[0].mxu0 %v349
    %v861 = vpop.f32.mrb[0].mxu0
    %v862 = vadd.f32 %v792, %v861
    %v863 = vpop.f32.mrb[0].mxu0
    %864 = vdwg.mxu0
    %865 = vmatprep.subr.mxu0 0.0
    %866 = vmatpush1.msra.mxu0 %v255
    %867 = vmatprep.subr.mxu0 0.0
    %868 = vmatpush1.msra.mxu0 %v256
    %869 = vmatprep.subr.mxu0 0.0
    %870 = vmatpush1.msra.mxu0 %v257
    %871 = vmatprep.subr.mxu0 0.0
    %872 = vmatpush1.msra.mxu0 %v258
    %873 = vmatprep.subr.mxu0 0.0
    %874 = vmatpush1.msra.mxu0 %v259
    %875 = vmatprep.subr.mxu0 0.0
    %876 = vmatpush1.msra.mxu0 %v260
    %877 = vmatprep.subr.mxu0 0.0
    %878 = vmatpush1.msra.mxu0 %v261
    %879 = vmatprep.subr.mxu0 0.0
    %880 = vmatpush1.msra.mxu0 %v262
    %881 = vmatprep.subr.mxu0 0.0
    %882 = vmatpush1.msra.mxu0 %v263
    %883 = vmatprep.subr.mxu0 0.0
    %884 = vmatpush1.msra.mxu0 %v264
    %885 = vmatprep.subr.mxu0 0.0
    %886 = vmatpush1.msra.mxu0 %v265
    %887 = vmatprep.subr.mxu0 0.0
    %888 = vmatpush1.msra.mxu0 %v266
    %889 = vmatprep.subr.mxu0 0.0
    %890 = vmatpush1.msra.mxu0 %v267
    %891 = vmatprep.subr.mxu0 0.0
    %892 = vmatpush1.msra.mxu0 %v268
    %893 = vmatprep.subr.mxu0 0.0
    %894 = vmatpush1.msra.mxu0 %v269
    %895 = vmatprep.subr.mxu0 0.0
    %896 = vmatpush1.msra.mxu0 %v270
    %897 = vmatprep.subr.mxu0 0.0
    %898 = vmatpush1.msra.mxu0 %v271
    %899 = vmatprep.subr.mxu0 0.0
    %900 = vmatpush1.msra.mxu0 %v272
    %901 = vmatprep.subr.mxu0 0.0
    %902 = vmatpush1.msra.mxu0 %v273
    %903 = vmatprep.subr.mxu0 0.0
    %904 = vmatpush1.msra.mxu0 %v274
    %905 = vmatprep.subr.mxu0 0.0
    %906 = vmatpush1.msra.mxu0 %v275
    %907 = vmatprep.subr.mxu0 0.0
    %908 = vmatpush1.msra.mxu0 %v276
    %909 = vmatprep.subr.mxu0 0.0
    %910 = vmatpush1.msra.mxu0 %v277
    %911 = vmatprep.subr.mxu0 0.0
    %912 = vmatpush1.msra.mxu0 %v278
    %913 = vmatprep.subr.mxu0 0.0
    %914 = vmatpush1.msra.mxu0 %v279
    %915 = vmatprep.subr.mxu0 0.0
    %916 = vmatpush1.msra.mxu0 %v280
    %917 = vmatprep.subr.mxu0 0.0
    %918 = vmatpush1.msra.mxu0 %v281
    %919 = vmatprep.subr.mxu0 0.0
    %920 = vmatpush1.msra.mxu0 %v282
    %921 = vmatprep.subr.mxu0 0.0
    %922 = vmatpush1.msra.mxu0 %v283
    %923 = vmatprep.subr.mxu0 0.0
    %924 = vmatpush1.msra.mxu0 %v284
    %925 = vmatprep.subr.mxu0 0.0
    %926 = vmatpush1.msra.mxu0 %v285
    %927 = vmatprep.subr.mxu0 0.0
    %928 = vmatpush1.msra.mxu0 %v286
    %929 = vmatprep.mubr.f32.mxu0 %v358
    %930 = vmatmul.mubr.f32.gmra.mrb[0].mxu0 %v356
    %v931 = vpop.f32.mrb[0].mxu0
    %v932 = vadd.f32 %v862, %v931
    %v933 = vpop.f32.mrb[0].mxu0
    %934 = vdwg.mxu0
    %v935 = vld [vmem:[%s3] sm:$0xff]
    %v936 = vld [vmem:[%s3 + $0x8] sm:$0xff]
    %v937 = vld [vmem:[%s3 + $0x10] sm:$0xff]
    %v938 = vld [vmem:[%s3 + $0x18] sm:$0xff]
    %v939 = vld [vmem:[%s4] sm:$0x1]
    %v941 = vlaneseq
    %v942 = vshrl.u32 %v941, 7
    %v943 = vsub.s32 0, %v942
    %v944 = vrot.slane %v939, %v943
    %vm946 = vcmask 261120
    %v948 = vsel %vm946, %v932, 0
    %950 = vmatprep.subr.mxu0 0.0
    %951 = vmatpush1.msra.mxu0 %v935
    %952 = vmatprep.subr.mxu0 0.0
    %953 = vmatpush1.msra.mxu0 %v936
    %954 = vmatprep.subr.mxu0 0.0
    %955 = vmatpush1.msra.mxu0 %v937
    %956 = vmatprep.subr.mxu0 0.0
    %957 = vmatpush1.msra.mxu0 %v938
    %958 = vmatprep.subr.mxu0 0.0
    %959 = vmatpush1.msra.mxu0 0.0
    %960 = vmatprep.subr.mxu0 0.0
    %961 = vmatpush1.msra.mxu0 0.0
    %962 = vmatprep.subr.mxu0 0.0
    %963 = vmatpush1.msra.mxu0 0.0
    %964 = vmatprep.subr.mxu0 0.0
    %965 = vmatpush1.msra.mxu0 0.0
    %966 = vmatprep.subr.mxu0 0.0
    %967 = vmatpush1.msra.mxu0 0.0
    %968 = vmatprep.subr.mxu0 0.0
    %969 = vmatpush1.msra.mxu0 0.0
    %970 = vmatprep.subr.mxu0 0.0
    %971 = vmatpush1.msra.mxu0 0.0
    %972 = vmatprep.subr.mxu0 0.0
    %973 = vmatpush1.msra.mxu0 0.0
    %974 = vmatprep.subr.mxu0 0.0
    %975 = vmatpush1.msra.mxu0 0.0
    %976 = vmatprep.subr.mxu0 0.0
    %977 = vmatpush1.msra.mxu0 0.0
    %978 = vmatprep.subr.mxu0 0.0
    %979 = vmatpush1.msra.mxu0 0.0
    %980 = vmatprep.subr.mxu0 0.0
    %981 = vmatpush1.msra.mxu0 0.0
    %982 = vmatprep.subr.mxu0 0.0
    %983 = vmatpush1.msra.mxu0 0.0
    %984 = vmatprep.subr.mxu0 0.0
    %985 = vmatpush1.msra.mxu0 0.0
    %986 = vmatprep.subr.mxu0 0.0
    %987 = vmatpush1.msra.mxu0 0.0
    %988 = vmatprep.subr.mxu0 0.0
    %989 = vmatpush1.msra.mxu0 0.0
    %990 = vmatprep.subr.mxu0 0.0
    %991 = vmatpush1.msra.mxu0 0.0
    %992 = vmatprep.subr.mxu0 0.0
    %993 = vmatpush1.msra.mxu0 0.0
    %994 = vmatprep.subr.mxu0 0.0
    %995 = vmatpush1.msra.mxu0 0.0
    %996 = vmatprep.subr.mxu0 0.0
    %997 = vmatpush1.msra.mxu0 0.0
    %998 = vmatprep.subr.mxu0 0.0
    %999 = vmatpush1.msra.mxu0 0.0
    %1000 = vmatprep.subr.mxu0 0.0
    %1001 = vmatpush1.msra.mxu0 0.0
    %1002 = vmatprep.subr.mxu0 0.0
    %1003 = vmatpush1.msra.mxu0 0.0
    %1004 = vmatprep.subr.mxu0 0.0
    %1005 = vmatpush1.msra.mxu0 0.0
    %1006 = vmatprep.subr.mxu0 0.0
    %1007 = vmatpush1.msra.mxu0 0.0
    %1008 = vmatprep.subr.mxu0 0.0
    %1009 = vmatpush1.msra.mxu0 0.0
    %1010 = vmatprep.subr.mxu0 0.0
    %1011 = vmatpush1.msra.mxu0 0.0
    %1012 = vmatprep.subr.mxu0 0.0
    %1013 = vmatpush1.msra.mxu0 0.0
    %1014 = vmatprep.mubr.f32.mxu0 0.0
    %1015 = vmatmul.mubr.f32.gmra.mrb[0].mxu0 %v948
    %v1016 = vpop.f32.mrb[0].mxu0
    %v1017 = vadd.f32 %v944, %v1016
    %v1018 = vpop.f32.mrb[0].mxu0
    %1019 = vdwg.mxu0
    %v1020 = vmax.f32 %v1017, 0.0
    %v1021 = vld [vmem:[%s5] sm:$0x3]
    %v1022 = vld [vmem:[%s6] sm:$0x1]
    %v1024 = vlaneseq
    %v1025 = vshrl.u32 %v1024, 7
    %v1026 = vsub.s32 0, %v1025
    %v1027 = vrot.slane %v1022, %v1026
    %vm1029 = vcmask 15360
    %v1031 = vsel %vm1029, %v1020, 0
    %vm1033 = vcmask 1041408
    %v1035 = vsel %vm1033, %v1021, 0
    %1037 = vmatprep.subr.mxu0 0.0
    %1038 = vmatpush1.msra.mxu0 %v1035
    %1039 = vmatprep.subr.mxu0 0.0
    %1040 = vmatpush1.msra.mxu0 0.0
    %1041 = vmatprep.subr.mxu0 0.0
    %1042 = vmatpush1.msra.mxu0 0.0
    %1043 = vmatprep.subr.mxu0 0.0
    %1044 = vmatpush1.msra.mxu0 0.0
    %1045 = vmatprep.subr.mxu0 0.0
    %1046 = vmatpush1.msra.mxu0 0.0
    %1047 = vmatprep.subr.mxu0 0.0
    %1048 = vmatpush1.msra.mxu0 0.0
    %1049 = vmatprep.subr.mxu0 0.0
    %1050 = vmatpush1.msra.mxu0 0.0
    %1051 = vmatprep.subr.mxu0 0.0
    %1052 = vmatpush1.msra.mxu0 0.0
    %1053 = vmatprep.subr.mxu0 0.0
    %1054 = vmatpush1.msra.mxu0 0.0
    %1055 = vmatprep.subr.mxu0 0.0
    %1056 = vmatpush1.msra.mxu0 0.0
    %1057 = vmatprep.subr.mxu0 0.0
    %1058 = vmatpush1.msra.mxu0 0.0
    %1059 = vmatprep.subr.mxu0 0.0
    %1060 = vmatpush1.msra.mxu0 0.0
    %1061 = vmatprep.subr.mxu0 0.0
    %1062 = vmatpush1.msra.mxu0 0.0
    %1063 = vmatprep.subr.mxu0 0.0
    %1064 = vmatpush1.msra.mxu0 0.0
    %1065 = vmatprep.subr.mxu0 0.0
    %1066 = vmatpush1.msra.mxu0 0.0
    %1067 = vmatprep.subr.mxu0 0.0
    %1068 = vmatpush1.msra.mxu0 0.0
    %1069 = vmatprep.subr.mxu0 0.0
    %1070 = vmatpush1.msra.mxu0 0.0
    %1071 = vmatprep.subr.mxu0 0.0
    %1072 = vmatpush1.msra.mxu0 0.0
    %1073 = vmatprep.subr.mxu0 0.0
    %1074 = vmatpush1.msra.mxu0 0.0
    %1075 = vmatprep.subr.mxu0 0.0
    %1076 = vmatpush1.msra.mxu0 0.0
    %1077 = vmatprep.subr.mxu0 0.0
    %1078 = vmatpush1.msra.mxu0 0.0
    %1079 = vmatprep.subr.mxu0 0.0
    %1080 = vmatpush1.msra.mxu0 0.0
    %1081 = vmatprep.subr.mxu0 0.0
    %1082 = vmatpush1.msra.mxu0 0.0
    %1083 = vmatprep.subr.mxu0 0.0
    %1084 = vmatpush1.msra.mxu0 0.0
    %1085 = vmatprep.subr.mxu0 0.0
    %1086 = vmatpush1.msra.mxu0 0.0
    %1087 = vmatprep.subr.mxu0 0.0
    %1088 = vmatpush1.msra.mxu0 0.0
    %1089 = vmatprep.subr.mxu0 0.0
    %1090 = vmatpush1.msra.mxu0 0.0
    %1091 = vmatprep.subr.mxu0 0.0
    %1092 = vmatpush1.msra.mxu0 0.0
    %1093 = vmatprep.subr.mxu0 0.0
    %1094 = vmatpush1.msra.mxu0 0.0
    %1095 = vmatprep.subr.mxu0 0.0
    %1096 = vmatpush1.msra.mxu0 0.0
    %1097 = vmatprep.subr.mxu0 0.0
    %1098 = vmatpush1.msra.mxu0 0.0
    %1099 = vmatprep.subr.mxu0 0.0
    %1100 = vmatpush1.msra.mxu0 0.0
    %1101 = vmatprep.mubr.f32.mxu0 0.0
    %1102 = vmatmul.mubr.f32.gmra.mrb[0].mxu0 %v1031
    %v1103 = vpop.f32.mrb[0].mxu0
    %v1104 = vadd.f32 %v1027, %v1103
    %v1105 = vpop.f32.mrb[0].mxu0
    %1106 = vdwg.mxu0
    %v1107 = vxor.u32 %v1104, 2147483648
    %v1108 = vmul.f32 %v1107, 1.442695
    %v1109 = vpow.pop %v1108
    %v1110 = vadd.f32 %v1109, 1.0
    %v1111 = vrcp.pop %v1110
    %v1112 = vmul.f32 1.0, %v1111
    %v1113 = vld [vmem:[%s2] sm:$0xff]
    %v1114 = vld [vmem:[%s2 + $0x8] sm:$0xff]
    %v1115 = vld [vmem:[%s2 + $0x10] sm:$0xff]
    %v1116 = vld [vmem:[%s2 + $0x18] sm:$0xff]
    %v1117 = vld [vmem:[%s2 + $0x20] sm:$0xff]
    %v1118 = vld [vmem:[%s2 + $0x28] sm:$0xff]
    %v1119 = vld [vmem:[%s2 + $0x30] sm:$0xff]
    %v1120 = vld [vmem:[%s2 + $0x38] sm:$0xff]
    %v1121 = vld [vmem:[%s2 + $0x40] sm:$0xff]
    %v1122 = vld [vmem:[%s2 + $0x48] sm:$0xff]
    %v1123 = vld [vmem:[%s2 + $0x50] sm:$0xff]
    %v1124 = vld [vmem:[%s2 + $0x58] sm:$0xff]
    %v1125 = vld [vmem:[%s2 + $0x60] sm:$0xff]
    %v1126 = vld [vmem:[%s2 + $0x68] sm:$0xff]
    %v1127 = vld [vmem:[%s2 + $0x70] sm:$0xff]
    %v1128 = vld [vmem:[%s2 + $0x78] sm:$0xff]
    %v1129 = vld [vmem:[%s2 + $0x80] sm:$0xff]
    %v1130 = vld [vmem:[%s2 + $0x88] sm:$0xff]
    %v1131 = vld [vmem:[%s2 + $0x90] sm:$0xff]
    %v1132 = vld [vmem:[%s2 + $0x98] sm:$0xff]
    %v1133 = vld [vmem:[%s2 + $0xa0] sm:$0xff]
    %v1134 = vld [vmem:[%s2 + $0xa8] sm:$0xff]
    %v1135 = vld [vmem:[%s2 + $0xb0] sm:$0xff]
    %v1136 = vld [vmem:[%s2 + $0xb8] sm:$0xff]
    %v1137 = vld [vmem:[%s2 + $0xc0] sm:$0xff]
    %v1138 = vld [vmem:[%s2 + $0xc8] sm:$0xff]
    %v1139 = vld [vmem:[%s2 + $0xd0] sm:$0xff]
    %v1140 = vld [vmem:[%s2 + $0xd8] sm:$0xff]
    %v1141 = vld [vmem:[%s2 + $0xe0] sm:$0xff]
    %v1142 = vld [vmem:[%s2 + $0xe8] sm:$0xff]
    %v1143 = vld [vmem:[%s2 + $0xf0] sm:$0xff]
    %v1144 = vld [vmem:[%s2 + $0xf8] sm:$0xff]
    %v1145 = vld [vmem:[%s2 + $0x100] sm:$0xff]
    %v1146 = vld [vmem:[%s2 + $0x108] sm:$0xff]
    %v1147 = vld [vmem:[%s2 + $0x110] sm:$0xff]
    %v1148 = vld [vmem:[%s2 + $0x118] sm:$0xff]
    %v1149 = vld [vmem:[%s2 + $0x120] sm:$0xff]
    %v1150 = vld [vmem:[%s2 + $0x128] sm:$0xff]
    %v1151 = vld [vmem:[%s2 + $0x130] sm:$0xff]
    %v1152 = vld [vmem:[%s2 + $0x138] sm:$0xff]
    %v1153 = vld [vmem:[%s2 + $0x140] sm:$0xff]
    %v1154 = vld [vmem:[%s2 + $0x148] sm:$0xff]
    %v1155 = vld [vmem:[%s2 + $0x150] sm:$0xff]
    %v1156 = vld [vmem:[%s2 + $0x158] sm:$0xff]
    %v1157 = vld [vmem:[%s2 + $0x160] sm:$0xff]
    %v1158 = vld [vmem:[%s2 + $0x168] sm:$0xff]
    %v1159 = vld [vmem:[%s2 + $0x170] sm:$0xff]
    %v1160 = vld [vmem:[%s2 + $0x178] sm:$0xff]
    %v1161 = vld [vmem:[%s2 + $0x180] sm:$0xff]
    %v1162 = vld [vmem:[%s2 + $0x188] sm:$0xff]
    %v1163 = vld [vmem:[%s2 + $0x190] sm:$0xff]
    %v1164 = vld [vmem:[%s2 + $0x198] sm:$0xff]
    %v1165 = vld [vmem:[%s2 + $0x1a0] sm:$0xff]
    %v1166 = vld [vmem:[%s2 + $0x1a8] sm:$0xff]
    %v1167 = vld [vmem:[%s2 + $0x1b0] sm:$0xff]
    %v1168 = vld [vmem:[%s2 + $0x1b8] sm:$0xff]
    %v1169 = vld [vmem:[%s2 + $0x1c0] sm:$0xff]
    %v1170 = vld [vmem:[%s2 + $0x1c8] sm:$0xff]
    %v1171 = vld [vmem:[%s2 + $0x1d0] sm:$0xff]
    %v1172 = vld [vmem:[%s2 + $0x1d8] sm:$0xff]
    %v1173 = vld [vmem:[%s2 + $0x1e0] sm:$0xff]
    %v1174 = vld [vmem:[%s2 + $0x1e8] sm:$0xff]
    %v1175 = vld [vmem:[%s2 + $0x1f0] sm:$0xff]
    %v1176 = vld [vmem:[%s2 + $0x1f8] sm:$0xff]
    %v1178 = vsel %vm946, %v1112, 0
    %1180 = vmatprep.subr.mxu0 %v1114
    %1181 = vmatpush1.msra.mxu0 %v1113
    %1182 = vmatprep.subr.mxu0 %v1130
    %1183 = vmatpush1.msra.mxu0 %v1129
    %1184 = vmatprep.subr.mxu0 %v1146
    %1185 = vmatpush1.msra.mxu0 %v1145
    %1186 = vmatprep.subr.mxu0 %v1162
    %1187 = vmatpush1.msra.mxu0 %v1161
    %1188 = vmatprep.subr.mxu0 0.0
    %1189 = vmatpush1.msra.mxu0 0.0
    %1190 = vmatprep.subr.mxu0 0.0
    %1191 = vmatpush1.msra.mxu0 0.0
    %1192 = vmatprep.subr.mxu0 0.0
    %1193 = vmatpush1.msra.mxu0 0.0
    %1194 = vmatprep.subr.mxu0 0.0
    %1195 = vmatpush1.msra.mxu0 0.0
    %1196 = vmatprep.subr.mxu0 0.0
    %1197 = vmatpush1.msra.mxu0 0.0
    %1198 = vmatprep.subr.mxu0 0.0
    %1199 = vmatpush1.msra.mxu0 0.0
    %1200 = vmatprep.subr.mxu0 0.0
    %1201 = vmatpush1.msra.mxu0 0.0
    %1202 = vmatprep.subr.mxu0 0.0
    %1203 = vmatpush1.msra.mxu0 0.0
    %1204 = vmatprep.subr.mxu0 0.0
    %1205 = vmatpush1.msra.mxu0 0.0
    %1206 = vmatprep.subr.mxu0 0.0
    %1207 = vmatpush1.msra.mxu0 0.0
    %1208 = vmatprep.subr.mxu0 0.0
    %1209 = vmatpush1.msra.mxu0 0.0
    %1210 = vmatprep.subr.mxu0 0.0
    %1211 = vmatpush1.msra.mxu0 0.0
    %1212 = vmatprep.subr.mxu0 0.0
    %1213 = vmatpush1.msra.mxu0 0.0
    %1214 = vmatprep.subr.mxu0 0.0
    %1215 = vmatpush1.msra.mxu0 0.0
    %1216 = vmatprep.subr.mxu0 0.0
    %1217 = vmatpush1.msra.mxu0 0.0
    %1218 = vmatprep.subr.mxu0 0.0
    %1219 = vmatpush1.msra.mxu0 0.0
    %1220 = vmatprep.subr.mxu0 0.0
    %1221 = vmatpush1.msra.mxu0 0.0
    %1222 = vmatprep.subr.mxu0 0.0
    %1223 = vmatpush1.msra.mxu0 0.0
    %1224 = vmatprep.subr.mxu0 0.0
    %1225 = vmatpush1.msra.mxu0 0.0
    %1226 = vmatprep.subr.mxu0 0.0
    %1227 = vmatpush1.msra.mxu0 0.0
    %1228 = vmatprep.subr.mxu0 0.0
    %1229 = vmatpush1.msra.mxu0 0.0
    %1230 = vmatprep.subr.mxu0 0.0
    %1231 = vmatpush1.msra.mxu0 0.0
    %1232 = vmatprep.subr.mxu0 0.0
    %1233 = vmatpush1.msra.mxu0 0.0
    %1234 = vmatprep.subr.mxu0 0.0
    %1235 = vmatpush1.msra.mxu0 0.0
    %1236 = vmatprep.subr.mxu0 0.0
    %1237 = vmatpush1.msra.mxu0 0.0
    %1238 = vmatprep.subr.mxu0 0.0
    %1239 = vmatpush1.msra.mxu0 0.0
    %1240 = vmatprep.subr.mxu0 0.0
    %1241 = vmatpush1.msra.mxu0 0.0
    %1242 = vmatprep.subr.mxu0 0.0
    %1243 = vmatpush1.msra.mxu0 0.0
    %1244 = vmatprep.mubr.f32.mxu0 0.0
    %1245 = vmatmul.mubr.f32.gmra.mrb[0].mxu0 %v1178
    %v1246 = vpop.f32.mrb[0].mxu0
    %v1247 = vadd.f32 0.0, %v1246
    %v1248 = vpop.f32.mrb[0].mxu0
    %v1249 = vadd.f32 0.0, %v1248
    %1250 = vdwg.mxu0
    %1251 = vmatprep.subr.mxu0 %v1116
    %1252 = vmatpush1.msra.mxu0 %v1115
    %1253 = vmatprep.subr.mxu0 %v1132
    %1254 = vmatpush1.msra.mxu0 %v1131
    %1255 = vmatprep.subr.mxu0 %v1148
    %1256 = vmatpush1.msra.mxu0 %v1147
    %1257 = vmatprep.subr.mxu0 %v1164
    %1258 = vmatpush1.msra.mxu0 %v1163
    %1259 = vmatprep.subr.mxu0 0.0
    %1260 = vmatpush1.msra.mxu0 0.0
    %1261 = vmatprep.subr.mxu0 0.0
    %1262 = vmatpush1.msra.mxu0 0.0
    %1263 = vmatprep.subr.mxu0 0.0
    %1264 = vmatpush1.msra.mxu0 0.0
    %1265 = vmatprep.subr.mxu0 0.0
    %1266 = vmatpush1.msra.mxu0 0.0
    %1267 = vmatprep.subr.mxu0 0.0
    %1268 = vmatpush1.msra.mxu0 0.0
    %1269 = vmatprep.subr.mxu0 0.0
    %1270 = vmatpush1.msra.mxu0 0.0
    %1271 = vmatprep.subr.mxu0 0.0
    %1272 = vmatpush1.msra.mxu0 0.0
    %1273 = vmatprep.subr.mxu0 0.0
    %1274 = vmatpush1.msra.mxu0 0.0
    %1275 = vmatprep.subr.mxu0 0.0
    %1276 = vmatpush1.msra.mxu0 0.0
    %1277 = vmatprep.subr.mxu0 0.0
    %1278 = vmatpush1.msra.mxu0 0.0
    %1279 = vmatprep.subr.mxu0 0.0
    %1280 = vmatpush1.msra.mxu0 0.0
    %1281 = vmatprep.subr.mxu0 0.0
    %1282 = vmatpush1.msra.mxu0 0.0
    %1283 = vmatprep.subr.mxu0 0.0
    %1284 = vmatpush1.msra.mxu0 0.0
    %1285 = vmatprep.subr.mxu0 0.0
    %1286 = vmatpush1.msra.mxu0 0.0
    %1287 = vmatprep.subr.mxu0 0.0
    %1288 = vmatpush1.msra.mxu0 0.0
    %1289 = vmatprep.subr.mxu0 0.0
    %1290 = vmatpush1.msra.mxu0 0.0
    %1291 = vmatprep.subr.mxu0 0.0
    %1292 = vmatpush1.msra.mxu0 0.0
    %1293 = vmatprep.subr.mxu0 0.0
    %1294 = vmatpush1.msra.mxu0 0.0
    %1295 = vmatprep.subr.mxu0 0.0
    %1296 = vmatpush1.msra.mxu0 0.0
    %1297 = vmatprep.subr.mxu0 0.0
    %1298 = vmatpush1.msra.mxu0 0.0
    %1299 = vmatprep.subr.mxu0 0.0
    %1300 = vmatpush1.msra.mxu0 0.0
    %1301 = vmatprep.subr.mxu0 0.0
    %1302 = vmatpush1.msra.mxu0 0.0
    %1303 = vmatprep.subr.mxu0 0.0
    %1304 = vmatpush1.msra.mxu0 0.0
    %1305 = vmatprep.subr.mxu0 0.0
    %1306 = vmatpush1.msra.mxu0 0.0
    %1307 = vmatprep.subr.mxu0 0.0
    %1308 = vmatpush1.msra.mxu0 0.0
    %1309 = vmatprep.subr.mxu0 0.0
    %1310 = vmatpush1.msra.mxu0 0.0
    %1311 = vmatprep.subr.mxu0 0.0
    %1312 = vmatpush1.msra.mxu0 0.0
    %1313 = vmatprep.subr.mxu0 0.0
    %1314 = vmatpush1.msra.mxu0 0.0
    %1315 = vmatprep.mubr.f32.mxu0 0.0
    %1316 = vmatmul.mubr.f32.gmra.mrb[0].mxu0 %v1178
    %v1317 = vpop.f32.mrb[0].mxu0
    %v1318 = vadd.f32 0.0, %v1317
    %v1319 = vpop.f32.mrb[0].mxu0
    %v1320 = vadd.f32 0.0, %v1319
    %1321 = vdwg.mxu0
    %1322 = vmatprep.subr.mxu0 %v1118
    %1323 = vmatpush1.msra.mxu0 %v1117
    %1324 = vmatprep.subr.mxu0 %v1134
    %1325 = vmatpush1.msra.mxu0 %v1133
    %1326 = vmatprep.subr.mxu0 %v1150
    %1327 = vmatpush1.msra.mxu0 %v1149
    %1328 = vmatprep.subr.mxu0 %v1166
    %1329 = vmatpush1.msra.mxu0 %v1165
    %1330 = vmatprep.subr.mxu0 0.0
    %1331 = vmatpush1.msra.mxu0 0.0
    %1332 = vmatprep.subr.mxu0 0.0
    %1333 = vmatpush1.msra.mxu0 0.0
    %1334 = vmatprep.subr.mxu0 0.0
    %1335 = vmatpush1.msra.mxu0 0.0
    %1336 = vmatprep.subr.mxu0 0.0
    %1337 = vmatpush1.msra.mxu0 0.0
    %1338 = vmatprep.subr.mxu0 0.0
    %1339 = vmatpush1.msra.mxu0 0.0
    %1340 = vmatprep.subr.mxu0 0.0
    %1341 = vmatpush1.msra.mxu0 0.0
    %1342 = vmatprep.subr.mxu0 0.0
    %1343 = vmatpush1.msra.mxu0 0.0
    %1344 = vmatprep.subr.mxu0 0.0
    %1345 = vmatpush1.msra.mxu0 0.0
    %1346 = vmatprep.subr.mxu0 0.0
    %1347 = vmatpush1.msra.mxu0 0.0
    %1348 = vmatprep.subr.mxu0 0.0
    %1349 = vmatpush1.msra.mxu0 0.0
    %1350 = vmatprep.subr.mxu0 0.0
    %1351 = vmatpush1.msra.mxu0 0.0
    %1352 = vmatprep.subr.mxu0 0.0
    %1353 = vmatpush1.msra.mxu0 0.0
    %1354 = vmatprep.subr.mxu0 0.0
    %1355 = vmatpush1.msra.mxu0 0.0
    %1356 = vmatprep.subr.mxu0 0.0
    %1357 = vmatpush1.msra.mxu0 0.0
    %1358 = vmatprep.subr.mxu0 0.0
    %1359 = vmatpush1.msra.mxu0 0.0
    %1360 = vmatprep.subr.mxu0 0.0
    %1361 = vmatpush1.msra.mxu0 0.0
    %1362 = vmatprep.subr.mxu0 0.0
    %1363 = vmatpush1.msra.mxu0 0.0
    %1364 = vmatprep.subr.mxu0 0.0
    %1365 = vmatpush1.msra.mxu0 0.0
    %1366 = vmatprep.subr.mxu0 0.0
    %1367 = vmatpush1.msra.mxu0 0.0
    %1368 = vmatprep.subr.mxu0 0.0
    %1369 = vmatpush1.msra.mxu0 0.0
    %1370 = vmatprep.subr.mxu0 0.0
    %1371 = vmatpush1.msra.mxu0 0.0
    %1372 = vmatprep.subr.mxu0 0.0
    %1373 = vmatpush1.msra.mxu0 0.0
    %1374 = vmatprep.subr.mxu0 0.0
    %1375 = vmatpush1.msra.mxu0 0.0
    %1376 = vmatprep.subr.mxu0 0.0
    %1377 = vmatpush1.msra.mxu0 0.0
    %1378 = vmatprep.subr.mxu0 0.0
    %1379 = vmatpush1.msra.mxu0 0.0
    %1380 = vmatprep.subr.mxu0 0.0
    %1381 = vmatpush1.msra.mxu0 0.0
    %1382 = vmatprep.subr.mxu0 0.0
    %1383 = vmatpush1.msra.mxu0 0.0
    %1384 = vmatprep.subr.mxu0 0.0
    %1385 = vmatpush1.msra.mxu0 0.0
    %1386 = vmatprep.mubr.f32.mxu0 0.0
    %1387 = vmatmul.mubr.f32.gmra.mrb[0].mxu0 %v1178
    %v1388 = vpop.f32.mrb[0].mxu0
    %v1389 = vadd.f32 0.0, %v1388
    %v1390 = vpop.f32.mrb[0].mxu0
    %v1391 = vadd.f32 0.0, %v1390
    %1392 = vdwg.mxu0
    %1393 = vmatprep.subr.mxu0 %v1120
    %1394 = vmatpush1.msra.mxu0 %v1119
    %1395 = vmatprep.subr.mxu0 %v1136
    %1396 = vmatpush1.msra.mxu0 %v1135
    %1397 = vmatprep.subr.mxu0 %v1152
    %1398 = vmatpush1.msra.mxu0 %v1151
    %1399 = vmatprep.subr.mxu0 %v1168
    %1400 = vmatpush1.msra.mxu0 %v1167
    %1401 = vmatprep.subr.mxu0 0.0
    %1402 = vmatpush1.msra.mxu0 0.0
    %1403 = vmatprep.subr.mxu0 0.0
    %1404 = vmatpush1.msra.mxu0 0.0
    %1405 = vmatprep.subr.mxu0 0.0
    %1406 = vmatpush1.msra.mxu0 0.0
    %1407 = vmatprep.subr.mxu0 0.0
    %1408 = vmatpush1.msra.mxu0 0.0
    %1409 = vmatprep.subr.mxu0 0.0
    %1410 = vmatpush1.msra.mxu0 0.0
    %1411 = vmatprep.subr.mxu0 0.0
    %1412 = vmatpush1.msra.mxu0 0.0
    %1413 = vmatprep.subr.mxu0 0.0
    %1414 = vmatpush1.msra.mxu0 0.0
    %1415 = vmatprep.subr.mxu0 0.0
    %1416 = vmatpush1.msra.mxu0 0.0
    %1417 = vmatprep.subr.mxu0 0.0
    %1418 = vmatpush1.msra.mxu0 0.0
    %1419 = vmatprep.subr.mxu0 0.0
    %1420 = vmatpush1.msra.mxu0 0.0
    %1421 = vmatprep.subr.mxu0 0.0
    %1422 = vmatpush1.msra.mxu0 0.0
    %1423 = vmatprep.subr.mxu0 0.0
    %1424 = vmatpush1.msra.mxu0 0.0
    %1425 = vmatprep.subr.mxu0 0.0
    %1426 = vmatpush1.msra.mxu0 0.0
    %1427 = vmatprep.subr.mxu0 0.0
    %1428 = vmatpush1.msra.mxu0 0.0
    %1429 = vmatprep.subr.mxu0 0.0
    %1430 = vmatpush1.msra.mxu0 0.0
    %1431 = vmatprep.subr.mxu0 0.0
    %1432 = vmatpush1.msra.mxu0 0.0
    %1433 = vmatprep.subr.mxu0 0.0
    %1434 = vmatpush1.msra.mxu0 0.0
    %1435 = vmatprep.subr.mxu0 0.0
    %1436 = vmatpush1.msra.mxu0 0.0
    %1437 = vmatprep.subr.mxu0 0.0
    %1438 = vmatpush1.msra.mxu0 0.0
    %1439 = vmatprep.subr.mxu0 0.0
    %1440 = vmatpush1.msra.mxu0 0.0
    %1441 = vmatprep.subr.mxu0 0.0
    %1442 = vmatpush1.msra.mxu0 0.0
    %1443 = vmatprep.subr.mxu0 0.0
    %1444 = vmatpush1.msra.mxu0 0.0
    %1445 = vmatprep.subr.mxu0 0.0
    %1446 = vmatpush1.msra.mxu0 0.0
    %1447 = vmatprep.subr.mxu0 0.0
    %1448 = vmatpush1.msra.mxu0 0.0
    %1449 = vmatprep.subr.mxu0 0.0
    %1450 = vmatpush1.msra.mxu0 0.0
    %1451 = vmatprep.subr.mxu0 0.0
    %1452 = vmatpush1.msra.mxu0 0.0
    %1453 = vmatprep.subr.mxu0 0.0
    %1454 = vmatpush1.msra.mxu0 0.0
    %1455 = vmatprep.subr.mxu0 0.0
    %1456 = vmatpush1.msra.mxu0 0.0
    %1457 = vmatprep.mubr.f32.mxu0 0.0
    %1458 = vmatmul.mubr.f32.gmra.mrb[0].mxu0 %v1178
    %v1459 = vpop.f32.mrb[0].mxu0
    %v1460 = vadd.f32 0.0, %v1459
    %v1461 = vpop.f32.mrb[0].mxu0
    %v1462 = vadd.f32 0.0, %v1461
    %1463 = vdwg.mxu0
    %1464 = vmatprep.subr.mxu0 %v1122
    %1465 = vmatpush1.msra.mxu0 %v1121
    %1466 = vmatprep.subr.mxu0 %v1138
    %1467 = vmatpush1.msra.mxu0 %v1137
    %1468 = vmatprep.subr.mxu0 %v1154
    %1469 = vmatpush1.msra.mxu0 %v1153
    %1470 = vmatprep.subr.mxu0 %v1170
    %1471 = vmatpush1.msra.mxu0 %v1169
    %1472 = vmatprep.subr.mxu0 0.0
    %1473 = vmatpush1.msra.mxu0 0.0
    %1474 = vmatprep.subr.mxu0 0.0
    %1475 = vmatpush1.msra.mxu0 0.0
    %1476 = vmatprep.subr.mxu0 0.0
    %1477 = vmatpush1.msra.mxu0 0.0
    %1478 = vmatprep.subr.mxu0 0.0
    %1479 = vmatpush1.msra.mxu0 0.0
    %1480 = vmatprep.subr.mxu0 0.0
    %1481 = vmatpush1.msra.mxu0 0.0
    %1482 = vmatprep.subr.mxu0 0.0
    %1483 = vmatpush1.msra.mxu0 0.0
    %1484 = vmatprep.subr.mxu0 0.0
    %1485 = vmatpush1.msra.mxu0 0.0
    %1486 = vmatprep.subr.mxu0 0.0
    %1487 = vmatpush1.msra.mxu0 0.0
    %1488 = vmatprep.subr.mxu0 0.0
    %1489 = vmatpush1.msra.mxu0 0.0
    %1490 = vmatprep.subr.mxu0 0.0
    %1491 = vmatpush1.msra.mxu0 0.0
    %1492 = vmatprep.subr.mxu0 0.0
    %1493 = vmatpush1.msra.mxu0 0.0
    %1494 = vmatprep.subr.mxu0 0.0
    %1495 = vmatpush1.msra.mxu0 0.0
    %1496 = vmatprep.subr.mxu0 0.0
    %1497 = vmatpush1.msra.mxu0 0.0
    %1498 = vmatprep.subr.mxu0 0.0
    %1499 = vmatpush1.msra.mxu0 0.0
    %1500 = vmatprep.subr.mxu0 0.0
    %1501 = vmatpush1.msra.mxu0 0.0
    %1502 = vmatprep.subr.mxu0 0.0
    %1503 = vmatpush1.msra.mxu0 0.0
    %1504 = vmatprep.subr.mxu0 0.0
    %1505 = vmatpush1.msra.mxu0 0.0
    %1506 = vmatprep.subr.mxu0 0.0
    %1507 = vmatpush1.msra.mxu0 0.0
    %1508 = vmatprep.subr.mxu0 0.0
    %1509 = vmatpush1.msra.mxu0 0.0
    %1510 = vmatprep.subr.mxu0 0.0
    %1511 = vmatpush1.msra.mxu0 0.0
    %1512 = vmatprep.subr.mxu0 0.0
    %1513 = vmatpush1.msra.mxu0 0.0
    %1514 = vmatprep.subr.mxu0 0.0
    %1515 = vmatpush1.msra.mxu0 0.0
    %1516 = vmatprep.subr.mxu0 0.0
    %1517 = vmatpush1.msra.mxu0 0.0
    %1518 = vmatprep.subr.mxu0 0.0
    %1519 = vmatpush1.msra.mxu0 0.0
    %1520 = vmatprep.subr.mxu0 0.0
    %1521 = vmatpush1.msra.mxu0 0.0
    %1522 = vmatprep.subr.mxu0 0.0
    %1523 = vmatpush1.msra.mxu0 0.0
    %1524 = vmatprep.subr.mxu0 0.0
    %1525 = vmatpush1.msra.mxu0 0.0
    %1526 = vmatprep.subr.mxu0 0.0
    %1527 = vmatpush1.msra.mxu0 0.0
    %1528 = vmatprep.mubr.f32.mxu0 0.0
    %1529 = vmatmul.mubr.f32.gmra.mrb[0].mxu0 %v1178
    %v1530 = vpop.f32.mrb[0].mxu0
    %v1531 = vadd.f32 0.0, %v1530
    %v1532 = vpop.f32.mrb[0].mxu0
    %v1533 = vadd.f32 0.0, %v1532
    %1534 = vdwg.mxu0
    %1535 = vmatprep.subr.mxu0 %v1124
    %1536 = vmatpush1.msra.mxu0 %v1123
    %1537 = vmatprep.subr.mxu0 %v1140
    %1538 = vmatpush1.msra.mxu0 %v1139
    %1539 = vmatprep.subr.mxu0 %v1156
    %1540 = vmatpush1.msra.mxu0 %v1155
    %1541 = vmatprep.subr.mxu0 %v1172
    %1542 = vmatpush1.msra.mxu0 %v1171
    %1543 = vmatprep.subr.mxu0 0.0
    %1544 = vmatpush1.msra.mxu0 0.0
    %1545 = vmatprep.subr.mxu0 0.0
    %1546 = vmatpush1.msra.mxu0 0.0
    %1547 = vmatprep.subr.mxu0 0.0
    %1548 = vmatpush1.msra.mxu0 0.0
    %1549 = vmatprep.subr.mxu0 0.0
    %1550 = vmatpush1.msra.mxu0 0.0
    %1551 = vmatprep.subr.mxu0 0.0
    %1552 = vmatpush1.msra.mxu0 0.0
    %1553 = vmatprep.subr.mxu0 0.0
    %1554 = vmatpush1.msra.mxu0 0.0
    %1555 = vmatprep.subr.mxu0 0.0
    %1556 = vmatpush1.msra.mxu0 0.0
    %1557 = vmatprep.subr.mxu0 0.0
    %1558 = vmatpush1.msra.mxu0 0.0
    %1559 = vmatprep.subr.mxu0 0.0
    %1560 = vmatpush1.msra.mxu0 0.0
    %1561 = vmatprep.subr.mxu0 0.0
    %1562 = vmatpush1.msra.mxu0 0.0
    %1563 = vmatprep.subr.mxu0 0.0
    %1564 = vmatpush1.msra.mxu0 0.0
    %1565 = vmatprep.subr.mxu0 0.0
    %1566 = vmatpush1.msra.mxu0 0.0
    %1567 = vmatprep.subr.mxu0 0.0
    %1568 = vmatpush1.msra.mxu0 0.0
    %1569 = vmatprep.subr.mxu0 0.0
    %1570 = vmatpush1.msra.mxu0 0.0
    %1571 = vmatprep.subr.mxu0 0.0
    %1572 = vmatpush1.msra.mxu0 0.0
    %1573 = vmatprep.subr.mxu0 0.0
    %1574 = vmatpush1.msra.mxu0 0.0
    %1575 = vmatprep.subr.mxu0 0.0
    %1576 = vmatpush1.msra.mxu0 0.0
    %1577 = vmatprep.subr.mxu0 0.0
    %1578 = vmatpush1.msra.mxu0 0.0
    %1579 = vmatprep.subr.mxu0 0.0
    %1580 = vmatpush1.msra.mxu0 0.0
    %1581 = vmatprep.subr.mxu0 0.0
    %1582 = vmatpush1.msra.mxu0 0.0
    %1583 = vmatprep.subr.mxu0 0.0
    %1584 = vmatpush1.msra.mxu0 0.0
    %1585 = vmatprep.subr.mxu0 0.0
    %1586 = vmatpush1.msra.mxu0 0.0
    %1587 = vmatprep.subr.mxu0 0.0
    %1588 = vmatpush1.msra.mxu0 0.0
    %1589 = vmatprep.subr.mxu0 0.0
    %1590 = vmatpush1.msra.mxu0 0.0
    %1591 = vmatprep.subr.mxu0 0.0
    %1592 = vmatpush1.msra.mxu0 0.0
    %1593 = vmatprep.subr.mxu0 0.0
    %1594 = vmatpush1.msra.mxu0 0.0
    %1595 = vmatprep.subr.mxu0 0.0
    %1596 = vmatpush1.msra.mxu0 0.0
    %1597 = vmatprep.subr.mxu0 0.0
    %1598 = vmatpush1.msra.mxu0 0.0
    %1599 = vmatprep.mubr.f32.mxu0 0.0
    %1600 = vmatmul.mubr.f32.gmra.mrb[0].mxu0 %v1178
    %v1601 = vpop.f32.mrb[0].mxu0
    %v1602 = vadd.f32 0.0, %v1601
    %v1603 = vpop.f32.mrb[0].mxu0
    %v1604 = vadd.f32 0.0, %v1603
    %1605 = vdwg.mxu0
    %1606 = vmatprep.subr.mxu0 %v1126
    %1607 = vmatpush1.msra.mxu0 %v1125
    %1608 = vmatprep.subr.mxu0 %v1142
    %1609 = vmatpush1.msra.mxu0 %v1141
    %1610 = vmatprep.subr.mxu0 %v1158
    %1611 = vmatpush1.msra.mxu0 %v1157
    %1612 = vmatprep.subr.mxu0 %v1174
    %1613 = vmatpush1.msra.mxu0 %v1173
    %1614 = vmatprep.subr.mxu0 0.0
    %1615 = vmatpush1.msra.mxu0 0.0
    %1616 = vmatprep.subr.mxu0 0.0
    %1617 = vmatpush1.msra.mxu0 0.0
    %1618 = vmatprep.subr.mxu0 0.0
    %1619 = vmatpush1.msra.mxu0 0.0
    %1620 = vmatprep.subr.mxu0 0.0
    %1621 = vmatpush1.msra.mxu0 0.0
    %1622 = vmatprep.subr.mxu0 0.0
    %1623 = vmatpush1.msra.mxu0 0.0
    %1624 = vmatprep.subr.mxu0 0.0
    %1625 = vmatpush1.msra.mxu0 0.0
    %1626 = vmatprep.subr.mxu0 0.0
    %1627 = vmatpush1.msra.mxu0 0.0
    %1628 = vmatprep.subr.mxu0 0.0
    %1629 = vmatpush1.msra.mxu0 0.0
    %1630 = vmatprep.subr.mxu0 0.0
    %1631 = vmatpush1.msra.mxu0 0.0
    %1632 = vmatprep.subr.mxu0 0.0
    %1633 = vmatpush1.msra.mxu0 0.0
    %1634 = vmatprep.subr.mxu0 0.0
    %1635 = vmatpush1.msra.mxu0 0.0
    %1636 = vmatprep.subr.mxu0 0.0
    %1637 = vmatpush1.msra.mxu0 0.0
    %1638 = vmatprep.subr.mxu0 0.0
    %1639 = vmatpush1.msra.mxu0 0.0
    %1640 = vmatprep.subr.mxu0 0.0
    %1641 = vmatpush1.msra.mxu0 0.0
    %1642 = vmatprep.subr.mxu0 0.0
    %1643 = vmatpush1.msra.mxu0 0.0
    %1644 = vmatprep.subr.mxu0 0.0
    %1645 = vmatpush1.msra.mxu0 0.0
    %1646 = vmatprep.subr.mxu0 0.0
    %1647 = vmatpush1.msra.mxu0 0.0
    %1648 = vmatprep.subr.mxu0 0.0
    %1649 = vmatpush1.msra.mxu0 0.0
    %1650 = vmatprep.subr.mxu0 0.0
    %1651 = vmatpush1.msra.mxu0 0.0
    %1652 = vmatprep.subr.mxu0 0.0
    %1653 = vmatpush1.msra.mxu0 0.0
    %1654 = vmatprep.subr.mxu0 0.0
    %1655 = vmatpush1.msra.mxu0 0.0
    %1656 = vmatprep.subr.mxu0 0.0
    %1657 = vmatpush1.msra.mxu0 0.0
    %1658 = vmatprep.subr.mxu0 0.0
    %1659 = vmatpush1.msra.mxu0 0.0
    %1660 = vmatprep.subr.mxu0 0.0
    %1661 = vmatpush1.msra.mxu0 0.0
    %1662 = vmatprep.subr.mxu0 0.0
    %1663 = vmatpush1.msra.mxu0 0.0
    %1664 = vmatprep.subr.mxu0 0.0
    %1665 = vmatpush1.msra.mxu0 0.0
    %1666 = vmatprep.subr.mxu0 0.0
    %1667 = vmatpush1.msra.mxu0 0.0
    %1668 = vmatprep.subr.mxu0 0.0
    %1669 = vmatpush1.msra.mxu0 0.0
    %1670 = vmatprep.mubr.f32.mxu0 0.0
    %1671 = vmatmul.mubr.f32.gmra.mrb[0].mxu0 %v1178
    %v1672 = vpop.f32.mrb[0].mxu0
    %v1673 = vadd.f32 0.0, %v1672
    %v1674 = vpop.f32.mrb[0].mxu0
    %v1675 = vadd.f32 0.0, %v1674
    %1676 = vdwg.mxu0
    %1677 = vmatprep.subr.mxu0 %v1128
    %1678 = vmatpush1.msra.mxu0 %v1127
    %1679 = vmatprep.subr.mxu0 %v1144
    %1680 = vmatpush1.msra.mxu0 %v1143
    %1681 = vmatprep.subr.mxu0 %v1160
    %1682 = vmatpush1.msra.mxu0 %v1159
    %1683 = vmatprep.subr.mxu0 %v1176
    %1684 = vmatpush1.msra.mxu0 %v1175
    %1685 = vmatprep.subr.mxu0 0.0
    %1686 = vmatpush1.msra.mxu0 0.0
    %1687 = vmatprep.subr.mxu0 0.0
    %1688 = vmatpush1.msra.mxu0 0.0
    %1689 = vmatprep.subr.mxu0 0.0
    %1690 = vmatpush1.msra.mxu0 0.0
    %1691 = vmatprep.subr.mxu0 0.0
    %1692 = vmatpush1.msra.mxu0 0.0
    %1693 = vmatprep.subr.mxu0 0.0
    %1694 = vmatpush1.msra.mxu0 0.0
    %1695 = vmatprep.subr.mxu0 0.0
    %1696 = vmatpush1.msra.mxu0 0.0
    %1697 = vmatprep.subr.mxu0 0.0
    %1698 = vmatpush1.msra.mxu0 0.0
    %1699 = vmatprep.subr.mxu0 0.0
    %1700 = vmatpush1.msra.mxu0 0.0
    %1701 = vmatprep.subr.mxu0 0.0
    %1702 = vmatpush1.msra.mxu0 0.0
    %1703 = vmatprep.subr.mxu0 0.0
    %1704 = vmatpush1.msra.mxu0 0.0
    %1705 = vmatprep.subr.mxu0 0.0
    %1706 = vmatpush1.msra.mxu0 0.0
    %1707 = vmatprep.subr.mxu0 0.0
    %1708 = vmatpush1.msra.mxu0 0.0
    %1709 = vmatprep.subr.mxu0 0.0
    %1710 = vmatpush1.msra.mxu0 0.0
    %1711 = vmatprep.subr.mxu0 0.0
    %1712 = vmatpush1.msra.mxu0 0.0
    %1713 = vmatprep.subr.mxu0 0.0
    %1714 = vmatpush1.msra.mxu0 0.0
    %1715 = vmatprep.subr.mxu0 0.0
    %1716 = vmatpush1.msra.mxu0 0.0
    %1717 = vmatprep.subr.mxu0 0.0
    %1718 = vmatpush1.msra.mxu0 0.0
    %1719 = vmatprep.subr.mxu0 0.0
    %1720 = vmatpush1.msra.mxu0 0.0
    %1721 = vmatprep.subr.mxu0 0.0
    %1722 = vmatpush1.msra.mxu0 0.0
    %1723 = vmatprep.subr.mxu0 0.0
    %1724 = vmatpush1.msra.mxu0 0.0
    %1725 = vmatprep.subr.mxu0 0.0
    %1726 = vmatpush1.msra.mxu0 0.0
    %1727 = vmatprep.subr.mxu0 0.0
    %1728 = vmatpush1.msra.mxu0 0.0
    %1729 = vmatprep.subr.mxu0 0.0
    %1730 = vmatpush1.msra.mxu0 0.0
    %1731 = vmatprep.subr.mxu0 0.0
    %1732 = vmatpush1.msra.mxu0 0.0
    %1733 = vmatprep.subr.mxu0 0.0
    %1734 = vmatpush1.msra.mxu0 0.0
    %1735 = vmatprep.subr.mxu0 0.0
    %1736 = vmatpush1.msra.mxu0 0.0
    %1737 = vmatprep.subr.mxu0 0.0
    %1738 = vmatpush1.msra.mxu0 0.0
    %1739 = vmatprep.subr.mxu0 0.0
    %1740 = vmatpush1.msra.mxu0 0.0
    %1741 = vmatprep.mubr.f32.mxu0 0.0
    %1742 = vmatmul.mubr.f32.gmra.mrb[0].mxu0 %v1178
    %v1743 = vpop.f32.mrb[0].mxu0
    %v1744 = vadd.f32 0.0, %v1743
    %v1745 = vpop.f32.mrb[0].mxu0
    %v1746 = vadd.f32 0.0, %v1745
    %1747 = vdwg.mxu0
    %v1764 = vcombine.low %v1247, %v1249
    %v1765 = vcombine.low %v1318, %v1320
    %v1767 = vunpack.c.l.s4 1983009808
    %v1768 = vunpack.c.0.s8 %v1767
    %v1769 = vlaneseq
    %v1770 = vshrl.u32 %v1769, 7
    %v1771 = vsub.s32 %v1768, %v1770
    %v1772 = vrot.slane %v1764, %v1771
    %v1774 = vunpack.c.l.s4 1983009808
    %v1775 = vunpack.c.0.s8 %v1774
    %v1776 = vlaneseq
    %v1777 = vshrl.u32 %v1776, 7
    %v1778 = vsub.s32 %v1775, %v1777
    %v1779 = vrot.slane %v1765, %v1778
    %v1780 = vcombine.low %v1772, %v1779
    %v1781 = vcombine.low %v1389, %v1391
    %v1782 = vcombine.low %v1460, %v1462
    %v1784 = vunpack.c.l.s4 1983009808
    %v1785 = vunpack.c.0.s8 %v1784
    %v1786 = vlaneseq
    %v1787 = vshrl.u32 %v1786, 7
    %v1788 = vsub.s32 %v1785, %v1787
    %v1789 = vrot.slane %v1781, %v1788
    %v1791 = vunpack.c.l.s4 1983009808
    %v1792 = vunpack.c.0.s8 %v1791
    %v1793 = vlaneseq
    %v1794 = vshrl.u32 %v1793, 7
    %v1795 = vsub.s32 %v1792, %v1794
    %v1796 = vrot.slane %v1782, %v1795
    %v1797 = vcombine.low %v1789, %v1796
    %v1798 = vcombine.low %v1531, %v1533
    %v1799 = vcombine.low %v1602, %v1604
    %v1801 = vunpack.c.l.s4 1983009808
    %v1802 = vunpack.c.0.s8 %v1801
    %v1803 = vlaneseq
    %v1804 = vshrl.u32 %v1803, 7
    %v1805 = vsub.s32 %v1802, %v1804
    %v1806 = vrot.slane %v1798, %v1805
    %v1808 = vunpack.c.l.s4 1983009808
    %v1809 = vunpack.c.0.s8 %v1808
    %v1810 = vlaneseq
    %v1811 = vshrl.u32 %v1810, 7
    %v1812 = vsub.s32 %v1809, %v1811
    %v1813 = vrot.slane %v1799, %v1812
    %v1814 = vcombine.low %v1806, %v1813
    %v1815 = vcombine.low %v1673, %v1675
    %v1816 = vcombine.low %v1744, %v1746
    %v1818 = vunpack.c.l.s4 1983009808
    %v1819 = vunpack.c.0.s8 %v1818
    %v1820 = vlaneseq
    %v1821 = vshrl.u32 %v1820, 7
    %v1822 = vsub.s32 %v1819, %v1821
    %v1823 = vrot.slane %v1815, %v1822
    %v1825 = vunpack.c.l.s4 1983009808
    %v1826 = vunpack.c.0.s8 %v1825
    %v1827 = vlaneseq
    %v1828 = vshrl.u32 %v1827, 7
    %v1829 = vsub.s32 %v1826, %v1828
    %v1830 = vrot.slane %v1816, %v1829
    %v1831 = vcombine.low %v1823, %v1830
    %v1836 = vmul.f32 %v27, %v1780
    %v1837 = vmul.f32 %v28, %v1797
    %v1838 = vmul.f32 %v29, %v1814
    %v1839 = vmul.f32 %v30, %v1831
    %1840 = vst [vmem:[#allocation2] sm:$0xff] %v1836
    %1841 = vst [vmem:[#allocation2 + $0x8] sm:$0xff] %v1837
    %1842 = vst [vmem:[#allocation2 + $0x10] sm:$0xff] %v1838
    %1843 = vst [vmem:[#allocation2 + $0x18] sm:$0xff] %v1839
    // Predicated region
    $region30: #{tpu_custom_call.1} parent=1 // pred_check
      _
    $region31: #{tpu_custom_call.1} parent=1 // pred_check_branch
      %1845 = sbr.rel (0) target = $region33
    $region32: #{tpu_custom_call.1} parent=1 // pred_region
      %s1847 = ssub.s32 512, 512
      %1848 = vsyncadd [#allocation3], %s1847
      %s1850 = sshll.u32 [#allocation2], 4
      %s1851 = int_to_ptr.vmem [resolvable:$true] %s1850
      %1853 = dma.vmem_to_hbm [thread:$0]  %s1851, 512, %s7, [#allocation3]
    $region33: #{tpu_custom_call.1} parent=1 // pred_fallthru
      _
    // Predicated region
    $region34: #{tpu_custom_call.1} parent=1 // pred_check
      _
    $region35: #{tpu_custom_call.1} parent=1 // pred_check_branch
      %1855 = sbr.rel (0) target = $region37
    $region36: #{tpu_custom_call.1} parent=1 // pred_region
      %1856 = dma.done [#allocation3], 512
    $region37: #{tpu_custom_call.1} parent=1 // pred_fallthru
      _
    %1857 = vsyncpa [#allocation3], 1

</llo_original>
